<compile_context>
chip_gen: v5e
topology: v5e:2x2
jax: 0.10.0
libtpu: 0.0.40
codegen_flags: <defaults>
</compile_context>

<pallas_src>
import math

import jax
import jax.numpy as jnp
from jax.experimental import pallas as pl
from jax.experimental.pallas import tpu as pltpu

# ----------------- hparams stand-ins (deterministic, in-script) -----------------
HIDDEN = 32                  # hparams['transformer_hidden']
NUM_HEADS = 2                # hparams['diff_transformer_num_head']
HEAD_DIM = HIDDEN // NUM_HEADS
FFN_HIDDEN = 4 * HIDDEN
NUM_LAYERS = 2               # len(arch); must be even -> 1 in-layer + 1 out-layer
DROPOUT = 0.0                # hparams['diffusion_dropout']; inference => identity
LN_EPS = 1e-5
NEG_INF = -1e9
MM_DTYPE = jnp.bfloat16      # MXU operand dtype (accumulate in f32)
LANES = 128                  # lane width of the packed parameter slabs


# ------------------------- packed-parameter slab layouts -------------------------

def _build_weight_layout():
    entries = []
    for li in range(NUM_LAYERS):
        entries += [
            (f"{li}.w_qkv",      HIDDEN,     3 * HIDDEN),
            (f"{li}.w_out",      HIDDEN,     HIDDEN),
            (f"{li}.w_ffn1",     HIDDEN,     FFN_HIDDEN),
            (f"{li}.w_ffn2",     FFN_HIDDEN, HIDDEN),
            (f"{li}.w_skip_cat", 2 * HIDDEN, HIDDEN),
        ]
    entries.append(("w_skip_proj", HIDDEN, HIDDEN))
    layout, row = {}, 0
    for name, r, c in entries:
        layout[name] = (row, r, c)
        row += r
    return layout, row


def _build_vector_layout():
    names = []
    for li in range(NUM_LAYERS):
        for n in ["b_qkv", "b_out", "sa_ln_g", "sa_ln_b", "b_ffn1",
                  "b_ffn2", "ffn_ln_g", "ffn_ln_b", "b_skip_cat"]:
            names.append(f"{li}.{n}")
    names.append("b_skip_proj")
    layout = {name: row for row, name in enumerate(names)}
    rows_padded = ((len(names) + 7) // 8) * 8
    return layout, rows_padded


W_LAYOUT, W_ROWS = _build_weight_layout()      # W_ROWS = 608 (multiple of 16)
V_LAYOUT, V_ROWS = _build_vector_layout()      # V_ROWS = 24


# ================================ fused Pallas kernel ================================

def _fused_decoder_kernel(x_ref, bias_ref, w_ref, v_ref, o_ref):
    x = x_ref[0]                     # [T, C] f32 activations (one batch element)
    key_bias = bias_ref[0]           # [1, T] additive key-padding bias (0 / -1e9)

    def W(name):
        row, r, c = W_LAYOUT[name]
        return w_ref[row:row + r, :c]          # bf16 weight view (static ref slice)

    def V(name):
        row = V_LAYOUT[name]
        return v_ref[row:row + 1, :]           # f32 [1, 128] bias / LN row (zero-padded)

    def mm(a, w_bf16):
        # bf16 MXU operands, f32 accumulation (weights pre-cast in the wrapper).
        return jnp.dot(a.astype(MM_DTYPE), w_bf16, preferred_element_type=jnp.float32)

    def layernorm(z, g, b):
        mu = jnp.mean(z, axis=-1, keepdims=True)
        zc = z - mu
        var = jnp.mean(zc * zc, axis=-1, keepdims=True)
        return zc * jax.lax.rsqrt(var + LN_EPS) * g[:, :HIDDEN] + b[:, :HIDDEN]

    # TODO(synk): TransformerDecoderLayer source was not provided; this is a
    # canonical post-LN self-attention + FFN layer with a concat("cat") U-Net
    # skip, as implied by the "post_dualres_cat" name and the call site (the
    # layer-internal use of cond / diffusion_step / spk is unknown).
    def layer(z, li, skip=None):
        pre = f"{li}."
        if skip is not None:
            # concat([z, skip], -1) @ Wcat  ==  z @ Wcat[:C] + skip @ Wcat[C:]
            wsc = W(pre + "w_skip_cat")
            z = (mm(z, wsc[:HIDDEN, :]) + mm(skip, wsc[HIDDEN:, :])
                 + V(pre + "b_skip_cat")[:, :HIDDEN])

        # ----- self-attention block (post-LN); dropout = identity (eval) -----
        residual = z
        # 1/sqrt(HEAD_DIM) is folded into the Q columns of w_qkv / b_qkv at pack time.
        qkv = mm(z, W(pre + "w_qkv")) + V(pre + "b_qkv")[:, :3 * HIDDEN]   # [T, 3C]
        heads = []
        for h in range(NUM_HEADS):                               # static unroll
            lo, hi = h * HEAD_DIM, (h + 1) * HEAD_DIM
            q_h = qkv[:, lo:hi]
            k_h = qkv[:, HIDDEN + lo:HIDDEN + hi]
            v_h = qkv[:, 2 * HIDDEN + lo:2 * HIDDEN + hi]
            s = jax.lax.dot_general(                             # [T, T] scores, f32
                q_h.astype(MM_DTYPE), k_h.astype(MM_DTYPE),
                (((1,), (1,)), ((), ())),
                preferred_element_type=jnp.float32) + key_bias
            s = s - jnp.max(s, axis=-1, keepdims=True)
            pr = jnp.exp(s)
            pr = pr * pl.reciprocal(jnp.sum(pr, axis=-1, keepdims=True), approx=True)
            heads.append(mm(pr, v_h))                            # [T, D]
        # single lane-concat over heads + ONE output-projection matmul
        attn = (mm(jnp.concatenate(heads, axis=-1), W(pre + "w_out"))
                + V(pre + "b_out")[:, :HIDDEN])
        z = layernorm(residual + attn, V(pre + "sa_ln_g"), V(pre + "sa_ln_b"))
        sa_skip = z

        # ----- feed-forward block (post-LN) -----
        residual = z
        hdn = jnp.maximum(mm(z, W(pre + "w_ffn1")) + V(pre + "b_ffn1")[:, :FFN_HIDDEN], 0.0)
        z = layernorm(residual + mm(hdn, W(pre + "w_ffn2")) + V(pre + "b_ffn2")[:, :HIDDEN],
                      V(pre + "ffn_ln_g"), V(pre + "ffn_ln_b"))
        return z, sa_skip, z

    half = NUM_LAYERS // 2
    in_x_collect, ffn_skip_collect = [], []
    for li in range(half):
        x, _sa, ffn_skip = layer(x, li)
        in_x_collect.append(x)
        ffn_skip_collect.append(ffn_skip)
    for li in range(half, NUM_LAYERS):
        x, _sa, ffn_skip = layer(x, li, skip=in_x_collect.pop())
        ffn_skip_collect.append(ffn_skip)

    x = sum(ffn_skip_collect) * (1.0 / math.sqrt(len(ffn_skip_collect)))
    # skip_projection + relu
    x = jnp.maximum(mm(x, W("w_skip_proj")) + V("b_skip_proj")[:, :HIDDEN], 0.0)
    # NOTE: with C=32 this store uses 32/128 lanes; a lane-dense relayout of the
    # output is not worth an in-kernel reshape at this size (launch/DMA bound).
    o_ref[0] = x.astype(o_ref.dtype)


# ============================ params, packing & wrapper ============================

def init_layer_params(key, hidden, ffn_hidden):
    ks = jax.random.split(key, 5)
    s = 0.02
    return {
        # nn.MultiheadAttention in_proj (stored [in, out]) + out_proj
        "w_qkv": jax.random.normal(ks[0], (hidden, 3 * hidden), jnp.float32) * s,
        "b_qkv": jnp.zeros((3 * hidden,), jnp.float32),
        "w_out": jax.random.normal(ks[1], (hidden, hidden), jnp.float32) * s,
        "b_out": jnp.zeros((hidden,), jnp.float32),
        "sa_ln_g": jnp.ones((hidden,), jnp.float32),
        "sa_ln_b": jnp.zeros((hidden,), jnp.float32),
        "w_ffn1": jax.random.normal(ks[2], (hidden, ffn_hidden), jnp.float32) * s,
        "b_ffn1": jnp.zeros((ffn_hidden,), jnp.float32),
        "w_ffn2": jax.random.normal(ks[3], (ffn_hidden, hidden), jnp.float32) * s,
        "b_ffn2": jnp.zeros((hidden,), jnp.float32),
        "ffn_ln_g": jnp.ones((hidden,), jnp.float32),
        "ffn_ln_b": jnp.zeros((hidden,), jnp.float32),
        # "cat" skip: concat([x, skip], -1) -> Linear(2C, C) (used in out-layers only)
        "w_skip_cat": jax.random.normal(ks[4], (2 * hidden, hidden), jnp.float32) * s,
        "b_skip_cat": jnp.zeros((hidden,), jnp.float32),
    }


def init_decoder_params(key):
    half = NUM_LAYERS // 2
    ks = jax.random.split(key, NUM_LAYERS + 1)
    return {
        "in_layers": [init_layer_params(ks[i], HIDDEN, FFN_HIDDEN) for i in range(half)],
        "out_layers": [init_layer_params(ks[half + i], HIDDEN, FFN_HIDDEN) for i in range(half)],
        "w_skip_proj": jax.random.normal(ks[-1], (HIDDEN, HIDDEN), jnp.float32) * 0.02,
        "b_skip_proj": jnp.zeros((HIDDEN,), jnp.float32),
        # self.layer_norm is defined in __init__ but never used in forward
        "final_ln_g": jnp.ones((HIDDEN,), jnp.float32),
        "final_ln_b": jnp.zeros((HIDDEN,), jnp.float32),
    }


def _layer_params(params, li):
    half = NUM_LAYERS // 2
    return params["in_layers"][li] if li < half else params["out_layers"][li - half]


def pack_weight_slab(params):
    """All matmul weights -> one [W_ROWS, 128] bf16 slab (columns zero-padded)."""
    scale = 1.0 / math.sqrt(HEAD_DIM)

    def pad_w(w):
        return jnp.pad(w.astype(jnp.bfloat16), ((0, 0), (0, LANES - w.shape[1])))

    rows = []
    for li in range(NUM_LAYERS):
        lp = _layer_params(params, li)
        w_qkv = lp["w_qkv"].at[:, :HIDDEN].multiply(scale)     # fold attn scale into Q
        rows += [pad_w(w_qkv), pad_w(lp["w_out"]), pad_w(lp["w_ffn1"]),
                 pad_w(lp["w_ffn2"]), pad_w(lp["w_skip_cat"])]
    rows.append(pad_w(params["w_skip_proj"]))
    slab = jnp.concatenate(rows, axis=0)
    assert slab.shape == (W_ROWS, LANES)
    return slab


def pack_vector_slab(params):
    """All biases / LayerNorm params -> one [V_ROWS, 128] f32 slab (one row each)."""
    scale = 1.0 / math.sqrt(HEAD_DIM)

    def pad_v(v):
        v = v.astype(jnp.float32).reshape(1, -1)
        return jnp.pad(v, ((0, 0), (0, LANES - v.shape[1])))

    rows = []
    for li in range(NUM_LAYERS):
        lp = _layer_params(params, li)
        b_qkv = lp["b_qkv"].at[:HIDDEN].multiply(scale)        # fold attn scale into Q bias
        for v in [b_qkv, lp["b_out"], lp["sa_ln_g"], lp["sa_ln_b"], lp["b_ffn1"],
                  lp["b_ffn2"], lp["ffn_ln_g"], lp["ffn_ln_b"], lp["b_skip_cat"]]:
            rows.append(pad_v(v))
    rows.append(pad_v(params["b_skip_proj"]))
    slab = jnp.concatenate(rows, axis=0)
    slab = jnp.pad(slab, ((0, V_ROWS - slab.shape[0]), (0, 0)))
    return slab


def transformer_decoder_forward(params, x, cond, diffusion_step, mask):
    """x, cond, diffusion_step: [B, T, C]; mask: [B, T] (1.0/True = padded key)."""
    b, t, c = x.shape

    # x = x + cond ; F.dropout(eval) = identity ; the seq-first transpose in the
    # reference is a layout convention only ; x = x + diffusion_step.
    x_in = (x + cond + diffusion_step).astype(jnp.float32)

    # Per-batch additive key-padding bias row [B, 1, T] (0 valid / -1e9 padded),
    # broadcast against the [T, T] scores in-kernel (no O((B*T)^2) bias in HBM).
    # Note: a fully-padded batch row would make the softmax denominator ~0.
    key_bias = jnp.where(mask.astype(jnp.float32) >= 0.5, NEG_INF, 0.0)
    key_bias = key_bias.reshape(b, 1, t).astype(jnp.float32)

    w_slab = pack_weight_slab(params)     # [608, 128] bf16
    v_slab = pack_vector_slab(params)     # [ 24, 128] f32

    out = pl.pallas_call(
        _fused_decoder_kernel,
        out_shape=jax.ShapeDtypeStruct((b, t, c), x.dtype),
        grid=(b,),
        in_specs=[
            pl.BlockSpec((1, t, c), lambda i: (i, 0, 0)),        # activations (per batch)
            pl.BlockSpec((1, 1, t), lambda i: (i, 0, 0)),        # key-padding bias row
            pl.BlockSpec((W_ROWS, LANES), lambda i: (0, 0)),     # packed bf16 weights
            pl.BlockSpec((V_ROWS, LANES), lambda i: (0, 0)),     # packed f32 vectors
        ],
        out_specs=pl.BlockSpec((1, t, c), lambda i: (i, 0, 0)),
        compiler_params=pltpu.CompilerParams(
            dimension_semantics=("parallel",)),                  # 2 TCs on v7x
    )(x_in, key_bias, w_slab, v_slab)
    return out


# ==================================== main ====================================

if __name__ == "__main__":
    key = jax.random.PRNGKey(0)
    kx, kc, kd, kp = jax.random.split(key, 4)
    B, T, C = 2, 8, HIDDEN

    x = jax.random.normal(kx, (B, T, C), jnp.float32)
    cond = jax.random.normal(kc, (B, T, C), jnp.float32)
    diffusion_step = jax.random.normal(kd, (B, T, C), jnp.float32)
    # mask: 1.0 at padded positions (last 2 frames of batch index 1 are padding)
    mask = jnp.zeros((B, T), jnp.float32).at[1, T - 2:].set(1.0)

    params = init_decoder_params(kp)

    out = jax.jit(transformer_decoder_forward)(params, x, cond, diffusion_step, mask)
    out = jax.block_until_ready(out)
    assert out.shape == (B, T, C)
    assert bool(jnp.all(jnp.isfinite(out)))
    print("KERNEL_OK")
</pallas_src>

<mosaic_0001>
module attributes {stable_mosaic.version = 11 : i64} {
  func.func @_fused_decoder_kernel(%arg0: i32, %arg1: memref<1x8x32xf32, #tpu.memory_space<vmem>>, %arg2: memref<1x1x8xf32, #tpu.memory_space<vmem>>, %arg3: memref<608x128xbf16, #tpu.memory_space<vmem>>, %arg4: memref<24x128xf32, #tpu.memory_space<vmem>>, %arg5: memref<1x8x32xf32, #tpu.memory_space<vmem>>) attributes {dimension_semantics = [#tpu.dimension_semantics<parallel>], iteration_bounds = array<i64: 2>, scalar_prefetch = 0 : i64, scratch_operands = 0 : i64, tpu.core_type = #tpu.core_type<tc>, window_params = [{transform_indices = @transform_0, window_bounds = array<i64: 1, 8, 32>}, {transform_indices = @transform_1, window_bounds = array<i64: 1, 1, 8>}, {pipeline_mode = #tpu.pipeline_mode<synchronous>, transform_indices = @transform_2, window_bounds = array<i64: 608, 128>}, {pipeline_mode = #tpu.pipeline_mode<synchronous>, transform_indices = @transform_3, window_bounds = array<i64: 24, 128>}, {transform_indices = @transform_4, window_bounds = array<i64: 1, 8, 32>}]} {
    %c0 = arith.constant 0 : index
    %c0_0 = arith.constant 0 : index
    %c0_1 = arith.constant 0 : index
    %0 = vector.load %arg1[%c0, %c0_0, %c0_1] : memref<1x8x32xf32, #tpu.memory_space<vmem>>, vector<1x8x32xf32>
    %1 = vector.shape_cast %0 : vector<1x8x32xf32> to vector<8x32xf32>
    %c0_2 = arith.constant 0 : index
    %c0_3 = arith.constant 0 : index
    %c0_4 = arith.constant 0 : index
    %2 = vector.load %arg2[%c0_2, %c0_3, %c0_4] : memref<1x1x8xf32, #tpu.memory_space<vmem>>, vector<1x1x8xf32>
    %3 = vector.shape_cast %2 : vector<1x1x8xf32> to vector<1x8xf32>
    %c0_5 = arith.constant 0 : index
    %c0_6 = arith.constant 0 : index
    %4 = vector.load %arg3[%c0_5, %c0_6] : memref<608x128xbf16, #tpu.memory_space<vmem>>, vector<32x96xbf16>
    %5 = arith.truncf %1 : vector<8x32xf32> to vector<8x32xbf16>
    %cst = arith.constant dense<0.000000e+00> : vector<8x96xf32>
    %6 = tpu.matmul %5, %4, %cst {dimension_numbers = #tpu.dot_dimension_numbers<[1], [0], [0], [1], [0, 0, 1, 1], [], []>} : vector<8x32xbf16>, vector<32x96xbf16>, vector<8x96xf32> -> vector<8x96xf32>
    %c0_7 = arith.constant 0 : index
    %c0_8 = arith.constant 0 : index
    %7 = vector.load %arg4[%c0_7, %c0_8] : memref<24x128xf32, #tpu.memory_space<vmem>>, vector<1x128xf32>
    %8 = vector.extract_strided_slice %7 {offsets = [0, 0], sizes = [1, 96], strides = [1, 1]} : vector<1x128xf32> to vector<1x96xf32>
    %9 = vector.broadcast %8 : vector<1x96xf32> to vector<8x96xf32>
    %10 = arith.addf %6, %9 : vector<8x96xf32>
    %11 = vector.extract_strided_slice %10 {offsets = [0, 0], sizes = [8, 16], strides = [1, 1]} : vector<8x96xf32> to vector<8x16xf32>
    %12 = vector.extract_strided_slice %10 {offsets = [0, 32], sizes = [8, 16], strides = [1, 1]} : vector<8x96xf32> to vector<8x16xf32>
    %13 = vector.extract_strided_slice %10 {offsets = [0, 64], sizes = [8, 16], strides = [1, 1]} : vector<8x96xf32> to vector<8x16xf32>
    %14 = arith.truncf %11 : vector<8x16xf32> to vector<8x16xbf16>
    %15 = arith.truncf %12 : vector<8x16xf32> to vector<8x16xbf16>
    %cst_9 = arith.constant dense<0.000000e+00> : vector<8x8xf32>
    %16 = tpu.matmul %14, %15, %cst_9 {dimension_numbers = #tpu.dot_dimension_numbers<[1], [1], [0], [0], [0, 0, 1, 0], [], []>} : vector<8x16xbf16>, vector<8x16xbf16>, vector<8x8xf32> -> vector<8x8xf32>
    %17 = vector.broadcast %3 : vector<1x8xf32> to vector<8x8xf32>
    %18 = arith.addf %16, %17 : vector<8x8xf32>
    %cst_10 = arith.constant dense<0xFF800000> : vector<8xf32>
    %19 = vector.multi_reduction <maximumf>, %18, %cst_10 [1] : vector<8x8xf32> to vector<8xf32>
    %20 = vector.shape_cast %19 : vector<8xf32> to vector<8x1xf32>
    %21 = vector.broadcast %20 : vector<8x1xf32> to vector<8x8xf32>
    %22 = arith.subf %18, %21 : vector<8x8xf32>
    %23 = math.exp %22 : vector<8x8xf32>
    %cst_11 = arith.constant dense<0.000000e+00> : vector<8xf32>
    %24 = vector.multi_reduction <add>, %23, %cst_11 [1] : vector<8x8xf32> to vector<8xf32>
    %25 = vector.shape_cast %24 : vector<8xf32> to vector<8x1xf32>
    %26 = tpu.reciprocal %25 {approx = true} : vector<8x1xf32> -> vector<8x1xf32>
    %27 = vector.broadcast %26 : vector<8x1xf32> to vector<8x8xf32>
    %28 = arith.mulf %23, %27 : vector<8x8xf32>
    %29 = arith.truncf %28 : vector<8x8xf32> to vector<8x8xbf16>
    %cst_12 = arith.constant dense<0.000000e+00> : vector<8x16xf32>
    %30 = tpu.matmul %29, %13, %cst_12 {dimension_numbers = #tpu.dot_dimension_numbers<[1], [0], [0], [1], [0, 0, 1, 1], [], []>} : vector<8x8xbf16>, vector<8x16xf32>, vector<8x16xf32> -> vector<8x16xf32>
    %31 = vector.extract_strided_slice %10 {offsets = [0, 16], sizes = [8, 16], strides = [1, 1]} : vector<8x96xf32> to vector<8x16xf32>
    %32 = vector.extract_strided_slice %10 {offsets = [0, 48], sizes = [8, 16], strides = [1, 1]} : vector<8x96xf32> to vector<8x16xf32>
    %33 = vector.extract_strided_slice %10 {offsets = [0, 80], sizes = [8, 16], strides = [1, 1]} : vector<8x96xf32> to vector<8x16xf32>
    %34 = arith.truncf %31 : vector<8x16xf32> to vector<8x16xbf16>
    %35 = arith.truncf %32 : vector<8x16xf32> to vector<8x16xbf16>
    %cst_13 = arith.constant dense<0.000000e+00> : vector<8x8xf32>
    %36 = tpu.matmul %34, %35, %cst_13 {dimension_numbers = #tpu.dot_dimension_numbers<[1], [1], [0], [0], [0, 0, 1, 0], [], []>} : vector<8x16xbf16>, vector<8x16xbf16>, vector<8x8xf32> -> vector<8x8xf32>
    %37 = vector.broadcast %3 : vector<1x8xf32> to vector<8x8xf32>
    %38 = arith.addf %36, %37 : vector<8x8xf32>
    %cst_14 = arith.constant dense<0xFF800000> : vector<8xf32>
    %39 = vector.multi_reduction <maximumf>, %38, %cst_14 [1] : vector<8x8xf32> to vector<8xf32>
    %40 = vector.shape_cast %39 : vector<8xf32> to vector<8x1xf32>
    %41 = vector.broadcast %40 : vector<8x1xf32> to vector<8x8xf32>
    %42 = arith.subf %38, %41 : vector<8x8xf32>
    %43 = math.exp %42 : vector<8x8xf32>
    %cst_15 = arith.constant dense<0.000000e+00> : vector<8xf32>
    %44 = vector.multi_reduction <add>, %43, %cst_15 [1] : vector<8x8xf32> to vector<8xf32>
    %45 = vector.shape_cast %44 : vector<8xf32> to vector<8x1xf32>
    %46 = tpu.reciprocal %45 {approx = true} : vector<8x1xf32> -> vector<8x1xf32>
    %47 = vector.broadcast %46 : vector<8x1xf32> to vector<8x8xf32>
    %48 = arith.mulf %43, %47 : vector<8x8xf32>
    %49 = arith.truncf %48 : vector<8x8xf32> to vector<8x8xbf16>
    %cst_16 = arith.constant dense<0.000000e+00> : vector<8x16xf32>
    %50 = tpu.matmul %49, %33, %cst_16 {dimension_numbers = #tpu.dot_dimension_numbers<[1], [0], [0], [1], [0, 0, 1, 1], [], []>} : vector<8x8xbf16>, vector<8x16xf32>, vector<8x16xf32> -> vector<8x16xf32>
    %51 = tpu.concatenate %30, %50 in 1 : vector<8x16xf32>, vector<8x16xf32> -> vector<8x32xf32>
    %c32 = arith.constant 32 : index
    %c0_17 = arith.constant 0 : index
    %52 = vector.load %arg3[%c32, %c0_17] : memref<608x128xbf16, #tpu.memory_space<vmem>>, vector<32x32xbf16>
    %53 = arith.truncf %51 : vector<8x32xf32> to vector<8x32xbf16>
    %cst_18 = arith.constant dense<0.000000e+00> : vector<8x32xf32>
    %54 = tpu.matmul %53, %52, %cst_18 {dimension_numbers = #tpu.dot_dimension_numbers<[1], [0], [0], [1], [0, 0, 1, 1], [], []>} : vector<8x32xbf16>, vector<32x32xbf16>, vector<8x32xf32> -> vector<8x32xf32>
    %c1 = arith.constant 1 : index
    %c0_19 = arith.constant 0 : index
    %55 = vector.load %arg4[%c1, %c0_19] : memref<24x128xf32, #tpu.memory_space<vmem>>, vector<1x128xf32>
    %56 = vector.extract_strided_slice %55 {offsets = [0, 0], sizes = [1, 32], strides = [1, 1]} : vector<1x128xf32> to vector<1x32xf32>
    %57 = vector.broadcast %56 : vector<1x32xf32> to vector<8x32xf32>
    %58 = arith.addf %54, %57 : vector<8x32xf32>
    %59 = arith.addf %1, %58 : vector<8x32xf32>
    %c2 = arith.constant 2 : index
    %c0_20 = arith.constant 0 : index
    %60 = vector.load %arg4[%c2, %c0_20] : memref<24x128xf32, #tpu.memory_space<vmem>>, vector<1x128xf32>
    %c3 = arith.constant 3 : index
    %c0_21 = arith.constant 0 : index
    %61 = vector.load %arg4[%c3, %c0_21] : memref<24x128xf32, #tpu.memory_space<vmem>>, vector<1x128xf32>
    %cst_22 = arith.constant dense<0.000000e+00> : vector<8xf32>
    %62 = vector.multi_reduction <add>, %59, %cst_22 [1] : vector<8x32xf32> to vector<8xf32>
    %63 = vector.shape_cast %62 : vector<8xf32> to vector<8x1xf32>
    %cst_23 = arith.constant 3.200000e+01 : f32
    %64 = vector.broadcast %cst_23 : f32 to vector<8x1xf32>
    %65 = arith.divf %63, %64 : vector<8x1xf32>
    %66 = vector.broadcast %65 : vector<8x1xf32> to vector<8x32xf32>
    %67 = arith.subf %59, %66 : vector<8x32xf32>
    %68 = arith.mulf %67, %67 : vector<8x32xf32>
    %cst_24 = arith.constant dense<0.000000e+00> : vector<8xf32>
    %69 = vector.multi_reduction <add>, %68, %cst_24 [1] : vector<8x32xf32> to vector<8xf32>
    %70 = vector.shape_cast %69 : vector<8xf32> to vector<8x1xf32>
    %cst_25 = arith.constant 3.200000e+01 : f32
    %71 = vector.broadcast %cst_25 : f32 to vector<8x1xf32>
    %72 = arith.divf %70, %71 : vector<8x1xf32>
    %cst_26 = arith.constant 9.99999974E-6 : f32
    %73 = vector.broadcast %cst_26 : f32 to vector<8x1xf32>
    %74 = arith.addf %72, %73 : vector<8x1xf32>
    %75 = math.rsqrt %74 : vector<8x1xf32>
    %76 = vector.broadcast %75 : vector<8x1xf32> to vector<8x32xf32>
    %77 = arith.mulf %67, %76 : vector<8x32xf32>
    %78 = vector.extract_strided_slice %60 {offsets = [0, 0], sizes = [1, 32], strides = [1, 1]} : vector<1x128xf32> to vector<1x32xf32>
    %79 = vector.broadcast %78 : vector<1x32xf32> to vector<8x32xf32>
    %80 = arith.mulf %77, %79 : vector<8x32xf32>
    %81 = vector.extract_strided_slice %61 {offsets = [0, 0], sizes = [1, 32], strides = [1, 1]} : vector<1x128xf32> to vector<1x32xf32>
    %82 = vector.broadcast %81 : vector<1x32xf32> to vector<8x32xf32>
    %83 = arith.addf %80, %82 : vector<8x32xf32>
    %c64 = arith.constant 64 : index
    %c0_27 = arith.constant 0 : index
    %84 = vector.load %arg3[%c64, %c0_27] : memref<608x128xbf16, #tpu.memory_space<vmem>>, vector<32x128xbf16>
    %85 = arith.truncf %83 : vector<8x32xf32> to vector<8x32xbf16>
    %cst_28 = arith.constant dense<0.000000e+00> : vector<8x128xf32>
    %86 = tpu.matmul %85, %84, %cst_28 {dimension_numbers = #tpu.dot_dimension_numbers<[1], [0], [0], [1], [0, 0, 1, 1], [], []>} : vector<8x32xbf16>, vector<32x128xbf16>, vector<8x128xf32> -> vector<8x128xf32>
    %c4 = arith.constant 4 : index
    %c0_29 = arith.constant 0 : index
    %87 = vector.load %arg4[%c4, %c0_29] : memref<24x128xf32, #tpu.memory_space<vmem>>, vector<1x128xf32>
    %88 = vector.broadcast %87 : vector<1x128xf32> to vector<8x128xf32>
    %89 = arith.addf %86, %88 : vector<8x128xf32>
    %cst_30 = arith.constant 0.000000e+00 : f32
    %90 = vector.broadcast %cst_30 : f32 to vector<8x128xf32>
    %91 = arith.maximumf %89, %90 : vector<8x128xf32>
    %c96 = arith.constant 96 : index
    %c0_31 = arith.constant 0 : index
    %92 = vector.load %arg3[%c96, %c0_31] : memref<608x128xbf16, #tpu.memory_space<vmem>>, vector<128x32xbf16>
    %93 = arith.truncf %91 : vector<8x128xf32> to vector<8x128xbf16>
    %cst_32 = arith.constant dense<0.000000e+00> : vector<8x32xf32>
    %94 = tpu.matmul %93, %92, %cst_32 {dimension_numbers = #tpu.dot_dimension_numbers<[1], [0], [0], [1], [0, 0, 1, 1], [], []>} : vector<8x128xbf16>, vector<128x32xbf16>, vector<8x32xf32> -> vector<8x32xf32>
    %95 = arith.addf %83, %94 : vector<8x32xf32>
    %c5 = arith.constant 5 : index
    %c0_33 = arith.constant 0 : index
    %96 = vector.load %arg4[%c5, %c0_33] : memref<24x128xf32, #tpu.memory_space<vmem>>, vector<1x128xf32>
    %97 = vector.extract_strided_slice %96 {offsets = [0, 0], sizes = [1, 32], strides = [1, 1]} : vector<1x128xf32> to vector<1x32xf32>
    %98 = vector.broadcast %97 : vector<1x32xf32> to vector<8x32xf32>
    %99 = arith.addf %95, %98 : vector<8x32xf32>
    %c6 = arith.constant 6 : index
    %c0_34 = arith.constant 0 : index
    %100 = vector.load %arg4[%c6, %c0_34] : memref<24x128xf32, #tpu.memory_space<vmem>>, vector<1x128xf32>
    %c7 = arith.constant 7 : index
    %c0_35 = arith.constant 0 : index
    %101 = vector.load %arg4[%c7, %c0_35] : memref<24x128xf32, #tpu.memory_space<vmem>>, vector<1x128xf32>
    %cst_36 = arith.constant dense<0.000000e+00> : vector<8xf32>
    %102 = vector.multi_reduction <add>, %99, %cst_36 [1] : vector<8x32xf32> to vector<8xf32>
    %103 = vector.shape_cast %102 : vector<8xf32> to vector<8x1xf32>
    %cst_37 = arith.constant 3.200000e+01 : f32
    %104 = vector.broadcast %cst_37 : f32 to vector<8x1xf32>
    %105 = arith.divf %103, %104 : vector<8x1xf32>
    %106 = vector.broadcast %105 : vector<8x1xf32> to vector<8x32xf32>
    %107 = arith.subf %99, %106 : vector<8x32xf32>
    %108 = arith.mulf %107, %107 : vector<8x32xf32>
    %cst_38 = arith.constant dense<0.000000e+00> : vector<8xf32>
    %109 = vector.multi_reduction <add>, %108, %cst_38 [1] : vector<8x32xf32> to vector<8xf32>
    %110 = vector.shape_cast %109 : vector<8xf32> to vector<8x1xf32>
    %cst_39 = arith.constant 3.200000e+01 : f32
    %111 = vector.broadcast %cst_39 : f32 to vector<8x1xf32>
    %112 = arith.divf %110, %111 : vector<8x1xf32>
    %cst_40 = arith.constant 9.99999974E-6 : f32
    %113 = vector.broadcast %cst_40 : f32 to vector<8x1xf32>
    %114 = arith.addf %112, %113 : vector<8x1xf32>
    %115 = math.rsqrt %114 : vector<8x1xf32>
    %116 = vector.broadcast %115 : vector<8x1xf32> to vector<8x32xf32>
    %117 = arith.mulf %107, %116 : vector<8x32xf32>
    %118 = vector.extract_strided_slice %100 {offsets = [0, 0], sizes = [1, 32], strides = [1, 1]} : vector<1x128xf32> to vector<1x32xf32>
    %119 = vector.broadcast %118 : vector<1x32xf32> to vector<8x32xf32>
    %120 = arith.mulf %117, %119 : vector<8x32xf32>
    %121 = vector.extract_strided_slice %101 {offsets = [0, 0], sizes = [1, 32], strides = [1, 1]} : vector<1x128xf32> to vector<1x32xf32>
    %122 = vector.broadcast %121 : vector<1x32xf32> to vector<8x32xf32>
    %123 = arith.addf %120, %122 : vector<8x32xf32>
    %c512 = arith.constant 512 : index
    %c0_41 = arith.constant 0 : index
    %124 = vector.load %arg3[%c512, %c0_41] : memref<608x128xbf16, #tpu.memory_space<vmem>>, vector<64x32xbf16>
    %125 = vector.extract_strided_slice %124 {offsets = [0, 0], sizes = [32, 32], strides = [1, 1]} : vector<64x32xbf16> to vector<32x32xbf16>
    %126 = arith.truncf %123 : vector<8x32xf32> to vector<8x32xbf16>
    %cst_42 = arith.constant dense<0.000000e+00> : vector<8x32xf32>
    %127 = tpu.matmul %126, %125, %cst_42 {dimension_numbers = #tpu.dot_dimension_numbers<[1], [0], [0], [1], [0, 0, 1, 1], [], []>} : vector<8x32xbf16>, vector<32x32xbf16>, vector<8x32xf32> -> vector<8x32xf32>
    %128 = vector.extract_strided_slice %124 {offsets = [32, 0], sizes = [32, 32], strides = [1, 1]} : vector<64x32xbf16> to vector<32x32xbf16>
    %129 = arith.truncf %123 : vector<8x32xf32> to vector<8x32xbf16>
    %cst_43 = arith.constant dense<0.000000e+00> : vector<8x32xf32>
    %130 = tpu.matmul %129, %128, %cst_43 {dimension_numbers = #tpu.dot_dimension_numbers<[1], [0], [0], [1], [0, 0, 1, 1], [], []>} : vector<8x32xbf16>, vector<32x32xbf16>, vector<8x32xf32> -> vector<8x32xf32>
    %131 = arith.addf %127, %130 : vector<8x32xf32>
    %c17 = arith.constant 17 : index
    %c0_44 = arith.constant 0 : index
    %132 = vector.load %arg4[%c17, %c0_44] : memref<24x128xf32, #tpu.memory_space<vmem>>, vector<1x128xf32>
    %133 = vector.extract_strided_slice %132 {offsets = [0, 0], sizes = [1, 32], strides = [1, 1]} : vector<1x128xf32> to vector<1x32xf32>
    %134 = vector.broadcast %133 : vector<1x32xf32> to vector<8x32xf32>
    %135 = arith.addf %131, %134 : vector<8x32xf32>
    %c288 = arith.constant 288 : index
    %c0_45 = arith.constant 0 : index
    %136 = vector.load %arg3[%c288, %c0_45] : memref<608x128xbf16, #tpu.memory_space<vmem>>, vector<32x96xbf16>
    %137 = arith.truncf %135 : vector<8x32xf32> to vector<8x32xbf16>
    %cst_46 = arith.constant dense<0.000000e+00> : vector<8x96xf32>
    %138 = tpu.matmul %137, %136, %cst_46 {dimension_numbers = #tpu.dot_dimension_numbers<[1], [0], [0], [1], [0, 0, 1, 1], [], []>} : vector<8x32xbf16>, vector<32x96xbf16>, vector<8x96xf32> -> vector<8x96xf32>
    %c9 = arith.constant 9 : index
    %c0_47 = arith.constant 0 : index
    %139 = vector.load %arg4[%c9, %c0_47] : memref<24x128xf32, #tpu.memory_space<vmem>>, vector<1x128xf32>
    %140 = vector.extract_strided_slice %139 {offsets = [0, 0], sizes = [1, 96], strides = [1, 1]} : vector<1x128xf32> to vector<1x96xf32>
    %141 = vector.broadcast %140 : vector<1x96xf32> to vector<8x96xf32>
    %142 = arith.addf %138, %141 : vector<8x96xf32>
    %143 = vector.extract_strided_slice %142 {offsets = [0, 0], sizes = [8, 16], strides = [1, 1]} : vector<8x96xf32> to vector<8x16xf32>
    %144 = vector.extract_strided_slice %142 {offsets = [0, 32], sizes = [8, 16], strides = [1, 1]} : vector<8x96xf32> to vector<8x16xf32>
    %145 = vector.extract_strided_slice %142 {offsets = [0, 64], sizes = [8, 16], strides = [1, 1]} : vector<8x96xf32> to vector<8x16xf32>
    %146 = arith.truncf %143 : vector<8x16xf32> to vector<8x16xbf16>
    %147 = arith.truncf %144 : vector<8x16xf32> to vector<8x16xbf16>
    %cst_48 = arith.constant dense<0.000000e+00> : vector<8x8xf32>
    %148 = tpu.matmul %146, %147, %cst_48 {dimension_numbers = #tpu.dot_dimension_numbers<[1], [1], [0], [0], [0, 0, 1, 0], [], []>} : vector<8x16xbf16>, vector<8x16xbf16>, vector<8x8xf32> -> vector<8x8xf32>
    %149 = vector.broadcast %3 : vector<1x8xf32> to vector<8x8xf32>
    %150 = arith.addf %148, %149 : vector<8x8xf32>
    %cst_49 = arith.constant dense<0xFF800000> : vector<8xf32>
    %151 = vector.multi_reduction <maximumf>, %150, %cst_49 [1] : vector<8x8xf32> to vector<8xf32>
    %152 = vector.shape_cast %151 : vector<8xf32> to vector<8x1xf32>
    %153 = vector.broadcast %152 : vector<8x1xf32> to vector<8x8xf32>
    %154 = arith.subf %150, %153 : vector<8x8xf32>
    %155 = math.exp %154 : vector<8x8xf32>
    %cst_50 = arith.constant dense<0.000000e+00> : vector<8xf32>
    %156 = vector.multi_reduction <add>, %155, %cst_50 [1] : vector<8x8xf32> to vector<8xf32>
    %157 = vector.shape_cast %156 : vector<8xf32> to vector<8x1xf32>
    %158 = tpu.reciprocal %157 {approx = true} : vector<8x1xf32> -> vector<8x1xf32>
    %159 = vector.broadcast %158 : vector<8x1xf32> to vector<8x8xf32>
    %160 = arith.mulf %155, %159 : vector<8x8xf32>
    %161 = arith.truncf %160 : vector<8x8xf32> to vector<8x8xbf16>
    %cst_51 = arith.constant dense<0.000000e+00> : vector<8x16xf32>
    %162 = tpu.matmul %161, %145, %cst_51 {dimension_numbers = #tpu.dot_dimension_numbers<[1], [0], [0], [1], [0, 0, 1, 1], [], []>} : vector<8x8xbf16>, vector<8x16xf32>, vector<8x16xf32> -> vector<8x16xf32>
    %163 = vector.extract_strided_slice %142 {offsets = [0, 16], sizes = [8, 16], strides = [1, 1]} : vector<8x96xf32> to vector<8x16xf32>
    %164 = vector.extract_strided_slice %142 {offsets = [0, 48], sizes = [8, 16], strides = [1, 1]} : vector<8x96xf32> to vector<8x16xf32>
    %165 = vector.extract_strided_slice %142 {offsets = [0, 80], sizes = [8, 16], strides = [1, 1]} : vector<8x96xf32> to vector<8x16xf32>
    %166 = arith.truncf %163 : vector<8x16xf32> to vector<8x16xbf16>
    %167 = arith.truncf %164 : vector<8x16xf32> to vector<8x16xbf16>
    %cst_52 = arith.constant dense<0.000000e+00> : vector<8x8xf32>
    %168 = tpu.matmul %166, %167, %cst_52 {dimension_numbers = #tpu.dot_dimension_numbers<[1], [1], [0], [0], [0, 0, 1, 0], [], []>} : vector<8x16xbf16>, vector<8x16xbf16>, vector<8x8xf32> -> vector<8x8xf32>
    %169 = vector.broadcast %3 : vector<1x8xf32> to vector<8x8xf32>
    %170 = arith.addf %168, %169 : vector<8x8xf32>
    %cst_53 = arith.constant dense<0xFF800000> : vector<8xf32>
    %171 = vector.multi_reduction <maximumf>, %170, %cst_53 [1] : vector<8x8xf32> to vector<8xf32>
    %172 = vector.shape_cast %171 : vector<8xf32> to vector<8x1xf32>
    %173 = vector.broadcast %172 : vector<8x1xf32> to vector<8x8xf32>
    %174 = arith.subf %170, %173 : vector<8x8xf32>
    %175 = math.exp %174 : vector<8x8xf32>
    %cst_54 = arith.constant dense<0.000000e+00> : vector<8xf32>
    %176 = vector.multi_reduction <add>, %175, %cst_54 [1] : vector<8x8xf32> to vector<8xf32>
    %177 = vector.shape_cast %176 : vector<8xf32> to vector<8x1xf32>
    %178 = tpu.reciprocal %177 {approx = true} : vector<8x1xf32> -> vector<8x1xf32>
    %179 = vector.broadcast %178 : vector<8x1xf32> to vector<8x8xf32>
    %180 = arith.mulf %175, %179 : vector<8x8xf32>
    %181 = arith.truncf %180 : vector<8x8xf32> to vector<8x8xbf16>
    %cst_55 = arith.constant dense<0.000000e+00> : vector<8x16xf32>
    %182 = tpu.matmul %181, %165, %cst_55 {dimension_numbers = #tpu.dot_dimension_numbers<[1], [0], [0], [1], [0, 0, 1, 1], [], []>} : vector<8x8xbf16>, vector<8x16xf32>, vector<8x16xf32> -> vector<8x16xf32>
    %183 = tpu.concatenate %162, %182 in 1 : vector<8x16xf32>, vector<8x16xf32> -> vector<8x32xf32>
    %c320 = arith.constant 320 : index
    %c0_56 = arith.constant 0 : index
    %184 = vector.load %arg3[%c320, %c0_56] : memref<608x128xbf16, #tpu.memory_space<vmem>>, vector<32x32xbf16>
    %185 = arith.truncf %183 : vector<8x32xf32> to vector<8x32xbf16>
    %cst_57 = arith.constant dense<0.000000e+00> : vector<8x32xf32>
    %186 = tpu.matmul %185, %184, %cst_57 {dimension_numbers = #tpu.dot_dimension_numbers<[1], [0], [0], [1], [0, 0, 1, 1], [], []>} : vector<8x32xbf16>, vector<32x32xbf16>, vector<8x32xf32> -> vector<8x32xf32>
    %c10 = arith.constant 10 : index
    %c0_58 = arith.constant 0 : index
    %187 = vector.load %arg4[%c10, %c0_58] : memref<24x128xf32, #tpu.memory_space<vmem>>, vector<1x128xf32>
    %188 = vector.extract_strided_slice %187 {offsets = [0, 0], sizes = [1, 32], strides = [1, 1]} : vector<1x128xf32> to vector<1x32xf32>
    %189 = vector.broadcast %188 : vector<1x32xf32> to vector<8x32xf32>
    %190 = arith.addf %186, %189 : vector<8x32xf32>
    %191 = arith.addf %135, %190 : vector<8x32xf32>
    %c11 = arith.constant 11 : index
    %c0_59 = arith.constant 0 : index
    %192 = vector.load %arg4[%c11, %c0_59] : memref<24x128xf32, #tpu.memory_space<vmem>>, vector<1x128xf32>
    %c12 = arith.constant 12 : index
    %c0_60 = arith.constant 0 : index
    %193 = vector.load %arg4[%c12, %c0_60] : memref<24x128xf32, #tpu.memory_space<vmem>>, vector<1x128xf32>
    %cst_61 = arith.constant dense<0.000000e+00> : vector<8xf32>
    %194 = vector.multi_reduction <add>, %191, %cst_61 [1] : vector<8x32xf32> to vector<8xf32>
    %195 = vector.shape_cast %194 : vector<8xf32> to vector<8x1xf32>
    %cst_62 = arith.constant 3.200000e+01 : f32
    %196 = vector.broadcast %cst_62 : f32 to vector<8x1xf32>
    %197 = arith.divf %195, %196 : vector<8x1xf32>
    %198 = vector.broadcast %197 : vector<8x1xf32> to vector<8x32xf32>
    %199 = arith.subf %191, %198 : vector<8x32xf32>
    %200 = arith.mulf %199, %199 : vector<8x32xf32>
    %cst_63 = arith.constant dense<0.000000e+00> : vector<8xf32>
    %201 = vector.multi_reduction <add>, %200, %cst_63 [1] : vector<8x32xf32> to vector<8xf32>
    %202 = vector.shape_cast %201 : vector<8xf32> to vector<8x1xf32>
    %cst_64 = arith.constant 3.200000e+01 : f32
    %203 = vector.broadcast %cst_64 : f32 to vector<8x1xf32>
    %204 = arith.divf %202, %203 : vector<8x1xf32>
    %cst_65 = arith.constant 9.99999974E-6 : f32
    %205 = vector.broadcast %cst_65 : f32 to vector<8x1xf32>
    %206 = arith.addf %204, %205 : vector<8x1xf32>
    %207 = math.rsqrt %206 : vector<8x1xf32>
    %208 = vector.broadcast %207 : vector<8x1xf32> to vector<8x32xf32>
    %209 = arith.mulf %199, %208 : vector<8x32xf32>
    %210 = vector.extract_strided_slice %192 {offsets = [0, 0], sizes = [1, 32], strides = [1, 1]} : vector<1x128xf32> to vector<1x32xf32>
    %211 = vector.broadcast %210 : vector<1x32xf32> to vector<8x32xf32>
    %212 = arith.mulf %209, %211 : vector<8x32xf32>
    %213 = vector.extract_strided_slice %193 {offsets = [0, 0], sizes = [1, 32], strides = [1, 1]} : vector<1x128xf32> to vector<1x32xf32>
    %214 = vector.broadcast %213 : vector<1x32xf32> to vector<8x32xf32>
    %215 = arith.addf %212, %214 : vector<8x32xf32>
    %c352 = arith.constant 352 : index
    %c0_66 = arith.constant 0 : index
    %216 = vector.load %arg3[%c352, %c0_66] : memref<608x128xbf16, #tpu.memory_space<vmem>>, vector<32x128xbf16>
    %217 = arith.truncf %215 : vector<8x32xf32> to vector<8x32xbf16>
    %cst_67 = arith.constant dense<0.000000e+00> : vector<8x128xf32>
    %218 = tpu.matmul %217, %216, %cst_67 {dimension_numbers = #tpu.dot_dimension_numbers<[1], [0], [0], [1], [0, 0, 1, 1], [], []>} : vector<8x32xbf16>, vector<32x128xbf16>, vector<8x128xf32> -> vector<8x128xf32>
    %c13 = arith.constant 13 : index
    %c0_68 = arith.constant 0 : index
    %219 = vector.load %arg4[%c13, %c0_68] : memref<24x128xf32, #tpu.memory_space<vmem>>, vector<1x128xf32>
    %220 = vector.broadcast %219 : vector<1x128xf32> to vector<8x128xf32>
    %221 = arith.addf %218, %220 : vector<8x128xf32>
    %cst_69 = arith.constant 0.000000e+00 : f32
    %222 = vector.broadcast %cst_69 : f32 to vector<8x128xf32>
    %223 = arith.maximumf %221, %222 : vector<8x128xf32>
    %c384 = arith.constant 384 : index
    %c0_70 = arith.constant 0 : index
    %224 = vector.load %arg3[%c384, %c0_70] : memref<608x128xbf16, #tpu.memory_space<vmem>>, vector<128x32xbf16>
    %225 = arith.truncf %223 : vector<8x128xf32> to vector<8x128xbf16>
    %cst_71 = arith.constant dense<0.000000e+00> : vector<8x32xf32>
    %226 = tpu.matmul %225, %224, %cst_71 {dimension_numbers = #tpu.dot_dimension_numbers<[1], [0], [0], [1], [0, 0, 1, 1], [], []>} : vector<8x128xbf16>, vector<128x32xbf16>, vector<8x32xf32> -> vector<8x32xf32>
    %227 = arith.addf %215, %226 : vector<8x32xf32>
    %c14 = arith.constant 14 : index
    %c0_72 = arith.constant 0 : index
    %228 = vector.load %arg4[%c14, %c0_72] : memref<24x128xf32, #tpu.memory_space<vmem>>, vector<1x128xf32>
    %229 = vector.extract_strided_slice %228 {offsets = [0, 0], sizes = [1, 32], strides = [1, 1]} : vector<1x128xf32> to vector<1x32xf32>
    %230 = vector.broadcast %229 : vector<1x32xf32> to vector<8x32xf32>
    %231 = arith.addf %227, %230 : vector<8x32xf32>
    %c15 = arith.constant 15 : index
    %c0_73 = arith.constant 0 : index
    %232 = vector.load %arg4[%c15, %c0_73] : memref<24x128xf32, #tpu.memory_space<vmem>>, vector<1x128xf32>
    %c16 = arith.constant 16 : index
    %c0_74 = arith.constant 0 : index
    %233 = vector.load %arg4[%c16, %c0_74] : memref<24x128xf32, #tpu.memory_space<vmem>>, vector<1x128xf32>
    %cst_75 = arith.constant dense<0.000000e+00> : vector<8xf32>
    %234 = vector.multi_reduction <add>, %231, %cst_75 [1] : vector<8x32xf32> to vector<8xf32>
    %235 = vector.shape_cast %234 : vector<8xf32> to vector<8x1xf32>
    %cst_76 = arith.constant 3.200000e+01 : f32
    %236 = vector.broadcast %cst_76 : f32 to vector<8x1xf32>
    %237 = arith.divf %235, %236 : vector<8x1xf32>
    %238 = vector.broadcast %237 : vector<8x1xf32> to vector<8x32xf32>
    %239 = arith.subf %231, %238 : vector<8x32xf32>
    %240 = arith.mulf %239, %239 : vector<8x32xf32>
    %cst_77 = arith.constant dense<0.000000e+00> : vector<8xf32>
    %241 = vector.multi_reduction <add>, %240, %cst_77 [1] : vector<8x32xf32> to vector<8xf32>
    %242 = vector.shape_cast %241 : vector<8xf32> to vector<8x1xf32>
    %cst_78 = arith.constant 3.200000e+01 : f32
    %243 = vector.broadcast %cst_78 : f32 to vector<8x1xf32>
    %244 = arith.divf %242, %243 : vector<8x1xf32>
    %cst_79 = arith.constant 9.99999974E-6 : f32
    %245 = vector.broadcast %cst_79 : f32 to vector<8x1xf32>
    %246 = arith.addf %244, %245 : vector<8x1xf32>
    %247 = math.rsqrt %246 : vector<8x1xf32>
    %248 = vector.broadcast %247 : vector<8x1xf32> to vector<8x32xf32>
    %249 = arith.mulf %239, %248 : vector<8x32xf32>
    %250 = vector.extract_strided_slice %232 {offsets = [0, 0], sizes = [1, 32], strides = [1, 1]} : vector<1x128xf32> to vector<1x32xf32>
    %251 = vector.broadcast %250 : vector<1x32xf32> to vector<8x32xf32>
    %252 = arith.mulf %249, %251 : vector<8x32xf32>
    %253 = vector.extract_strided_slice %233 {offsets = [0, 0], sizes = [1, 32], strides = [1, 1]} : vector<1x128xf32> to vector<1x32xf32>
    %254 = vector.broadcast %253 : vector<1x32xf32> to vector<8x32xf32>
    %255 = arith.addf %252, %254 : vector<8x32xf32>
    %cst_80 = arith.constant 0.000000e+00 : f32
    %256 = vector.broadcast %cst_80 : f32 to vector<8x32xf32>
    %257 = arith.addf %256, %123 : vector<8x32xf32>
    %258 = arith.addf %257, %255 : vector<8x32xf32>
    %cst_81 = arith.constant 0.707106769 : f32
    %259 = vector.broadcast %cst_81 : f32 to vector<8x32xf32>
    %260 = arith.mulf %258, %259 : vector<8x32xf32>
    %c576 = arith.constant 576 : index
    %c0_82 = arith.constant 0 : index
    %261 = vector.load %arg3[%c576, %c0_82] : memref<608x128xbf16, #tpu.memory_space<vmem>>, vector<32x32xbf16>
    %262 = arith.truncf %260 : vector<8x32xf32> to vector<8x32xbf16>
    %cst_83 = arith.constant dense<0.000000e+00> : vector<8x32xf32>
    %263 = tpu.matmul %262, %261, %cst_83 {dimension_numbers = #tpu.dot_dimension_numbers<[1], [0], [0], [1], [0, 0, 1, 1], [], []>} : vector<8x32xbf16>, vector<32x32xbf16>, vector<8x32xf32> -> vector<8x32xf32>
    %c18 = arith.constant 18 : index
    %c0_84 = arith.constant 0 : index
    %264 = vector.load %arg4[%c18, %c0_84] : memref<24x128xf32, #tpu.memory_space<vmem>>, vector<1x128xf32>
    %265 = vector.extract_strided_slice %264 {offsets = [0, 0], sizes = [1, 32], strides = [1, 1]} : vector<1x128xf32> to vector<1x32xf32>
    %266 = vector.broadcast %265 : vector<1x32xf32> to vector<8x32xf32>
    %267 = arith.addf %263, %266 : vector<8x32xf32>
    %cst_85 = arith.constant 0.000000e+00 : f32
    %268 = vector.broadcast %cst_85 : f32 to vector<8x32xf32>
    %269 = arith.maximumf %267, %268 : vector<8x32xf32>
    %c0_86 = arith.constant 0 : index
    %c0_87 = arith.constant 0 : index
    %c0_88 = arith.constant 0 : index
    %270 = vector.load %arg5[%c0_86, %c0_87, %c0_88] : memref<1x8x32xf32, #tpu.memory_space<vmem>>, vector<1x8x32xf32>
    %271 = vector.shape_cast %270 : vector<1x8x32xf32> to vector<8x32xf32>
    %272 = vector.shape_cast %269 : vector<8x32xf32> to vector<1x8x32xf32>
    tpu.vector_store %arg5[%c0_86, %c0_87, %c0_88], %272 {strides = array<i32>} : memref<1x8x32xf32, #tpu.memory_space<vmem>>, vector<1x8x32xf32>,
    return
  }
  func.func @transform_0(%arg0: i32) -> (i32, i32, i32) {
    %c0_i32 = arith.constant 0 : i32
    %c0_i32_0 = arith.constant 0 : i32
    %c0_i32_1 = arith.constant 0 : i32
    return %arg0, %c0_i32, %c0_i32_0 : i32, i32, i32
  }
  func.func @transform_1(%arg0: i32) -> (i32, i32, i32) {
    %c0_i32 = arith.constant 0 : i32
    %c0_i32_0 = arith.constant 0 : i32
    %c0_i32_1 = arith.constant 0 : i32
    return %arg0, %c0_i32, %c0_i32_0 : i32, i32, i32
  }
  func.func @transform_2(%arg0: i32) -> (i32, i32) {
    %c0_i32 = arith.constant 0 : i32
    %c0_i32_0 = arith.constant 0 : i32
    %c0_i32_1 = arith.constant 0 : i32
    return %c0_i32, %c0_i32_0 : i32, i32
  }
  func.func @transform_3(%arg0: i32) -> (i32, i32) {
    %c0_i32 = arith.constant 0 : i32
    %c0_i32_0 = arith.constant 0 : i32
    %c0_i32_1 = arith.constant 0 : i32
    return %c0_i32, %c0_i32_0 : i32, i32
  }
  func.func @transform_4(%arg0: i32) -> (i32, i32, i32) {
    %c0_i32 = arith.constant 0 : i32
    %c0_i32_0 = arith.constant 0 : i32
    %c0_i32_1 = arith.constant 0 : i32
    return %arg0, %c0_i32, %c0_i32_0 : i32, i32, i32
  }
}

</mosaic_0001>

<llo_original>
// kernel: transformer_decoder_forward.1
$region0: #{transformer_decoder_forward.1}
  #allocation0 [shape = 'u32[]', space=smem, size = 0x4, offset = 0x4, fixed_abs, tag = 'smem constant byte address 0x4 - core index']
  #allocation1 [shape = 'u32[72,128]{1,0:T(1,128)}', space=vmem, size = 0x9000, scoped, tag = 'internal scratch']
  %s0 = inlined_call_operand.vmem [shape: f32[2,8,32], index: 0, kind: input, shape index: {}]
  %s1 = inlined_call_operand.vmem [shape: f32[2,1,8], index: 1, kind: input, shape index: {}]
  %s2 = inlined_call_operand.vmem [shape: bf16[608,128], index: 2, kind: input, shape index: {}]
  %s3 = inlined_call_operand.vmem [shape: f32[24,128], index: 3, kind: input, shape index: {}]
  %s4 = inlined_call_operand.hbm [shape: f32[2,8,32], index: 4, kind: output, shape index: {}]
  %s5 = sld [smem:[#allocation0]]
  $region49: #{transformer_decoder_forward.1} parent=0
    _
  %s7 = ssub.s32 1, %s5
  %s8 = scalar_select 0, %s7, %s5
  $region1: #{transformer_decoder_forward.1} parent=0
    #allocation2 [shape = 'u8[8192]{0}', space=vmem, size = 0x2000, scoped, tag = 'output window, operand 0']
    #allocation3 [shape = 's32[2]{0}', space=sflag, size = 0x8, scoped, tag = 'scoped memory for transformer_decoder_forward.1']
    %9 = vsyncpa [#allocation3], 0
    %s10 = scalar_lea.sflag [#allocation3], 1
    %11 = vsyncpa %s10, 0
    loop: start=0, step=1, limit=4
    $region2: #{transformer_decoder_forward.1} parent=1 // loop_pre_header
      _
    $region3: #{transformer_decoder_forward.1} parent=1 // loop_header
      %s13 = sphi 0, %s17
      %p14 = scmp.ge.s32.totalorder %s13, 4
      %s23 = sphi 0, %s25
      %s26 = sphi 0, %s23
      %s27 = sphi 0, %s26
      %s43 = sphi 0, %s27
      %s49 = sphi 0, %s51
      %s52 = sphi 0, %s49
      %s53 = sphi 0, %s52
      %s69 = sphi 0, %s53
      %s73 = sphi 0, %s73
      %s75 = sphi 0, %s73
      %s76 = sphi 0, %s75
      %s90 = sphi 0, %s76
      %s94 = sphi 0, %s94
      %s96 = sphi 0, %s94
      %s97 = sphi 0, %s96
      %s111 = sphi 0, %s97
      %s117 = sphi 0, %s119
      %s120 = sphi 0, %s117
      %s121 = sphi 0, %s120
      %s137 = sphi 0, %s121
    $region4: #{transformer_decoder_forward.1} parent=1 // loop_header_branch
      %16 = sbr.rel (%p14) target = $region8
    $region5: #{transformer_decoder_forward.1} parent=1 // loop_body
      %s18 = ssub.s32 %s13, 1
      %s19 = ssub.s32 %s13, 2
      %s20 = sadd.s32 %s13, 1
      %s21 = ssub.s32 %s13, %s20
      %p22 = scmp.eq.s32.totalorder %s21, 0
      %s24 = sadd.s32 %s23, 1
      %s25 = scalar_select %p22, %s23, %s24
      %p28 = pneg %p22
      %p29 = scmp.eq.s32.totalorder %s13, 1
      %p30 = por %p28, %p29
      %p31 = scmp.ne.s32.totalorder %s23, %s26
      %p32 = scmp.eq.s32.totalorder %s13, 0
      %p33 = por %p31, %p32
      %p34 = scmp.ne.s32.totalorder %s23, %s26
      %p35 = scmp.eq.s32.totalorder %s18, 1
      %p36 = por %p34, %p35
      %p37 = scmp.ne.s32.totalorder %s26, %s27
      %p38 = scmp.eq.s32.totalorder %s18, 0
      %p39 = por %p37, %p38
      %p40 = scmp.ne.s32.totalorder %s26, %s27
      %p41 = scmp.eq.s32.totalorder %s19, 1
      %p42 = por %p40, %p41
      %p44 = scmp.ne.s32.totalorder %s27, %s43
      %p45 = scmp.eq.s32.totalorder %s19, 0
      %p46 = por %p44, %p45
      %s47 = ssub.s32 %s13, %s20
      %p48 = scmp.eq.s32.totalorder %s47, 0
      %s50 = sadd.s32 %s49, 1
      %s51 = scalar_select %p48, %s49, %s50
      %p54 = pneg %p48
      %p55 = scmp.eq.s32.totalorder %s13, 1
      %p56 = por %p54, %p55
      %p57 = scmp.ne.s32.totalorder %s49, %s52
      %p58 = scmp.eq.s32.totalorder %s13, 0
      %p59 = por %p57, %p58
      %p60 = scmp.ne.s32.totalorder %s49, %s52
      %p61 = scmp.eq.s32.totalorder %s18, 1
      %p62 = por %p60, %p61
      %p63 = scmp.ne.s32.totalorder %s52, %s53
      %p64 = scmp.eq.s32.totalorder %s18, 0
      %p65 = por %p63, %p64
      %p66 = scmp.ne.s32.totalorder %s52, %s53
      %p67 = scmp.eq.s32.totalorder %s19, 1
      %p68 = por %p66, %p67
      %p70 = scmp.ne.s32.totalorder %s53, %s69
      %p71 = scmp.eq.s32.totalorder %s19, 0
      %p72 = por %p70, %p71
      %s74 = sadd.s32 %s73, 1
      %p77 = scmp.eq.s32.totalorder %s13, 1
      %p78 = scmp.ne.s32.totalorder %s73, %s75
      %p79 = scmp.eq.s32.totalorder %s13, 0
      %p80 = por %p78, %p79
      %p81 = scmp.ne.s32.totalorder %s73, %s75
      %p82 = scmp.eq.s32.totalorder %s18, 1
      %p83 = por %p81, %p82
      %p84 = scmp.ne.s32.totalorder %s75, %s76
      %p85 = scmp.eq.s32.totalorder %s18, 0
      %p86 = por %p84, %p85
      %p87 = scmp.ne.s32.totalorder %s75, %s76
      %p88 = scmp.eq.s32.totalorder %s19, 1
      %p89 = por %p87, %p88
      %p91 = scmp.ne.s32.totalorder %s76, %s90
      %p92 = scmp.eq.s32.totalorder %s19, 0
      %p93 = por %p91, %p92
      %s95 = sadd.s32 %s94, 1
      %p98 = scmp.eq.s32.totalorder %s13, 1
      %p99 = scmp.ne.s32.totalorder %s94, %s96
      %p100 = scmp.eq.s32.totalorder %s13, 0
      %p101 = por %p99, %p100
      %p102 = scmp.ne.s32.totalorder %s94, %s96
      %p103 = scmp.eq.s32.totalorder %s18, 1
      %p104 = por %p102, %p103
      %p105 = scmp.ne.s32.totalorder %s96, %s97
      %p106 = scmp.eq.s32.totalorder %s18, 0
      %p107 = por %p105, %p106
      %p108 = scmp.ne.s32.totalorder %s96, %s97
      %p109 = scmp.eq.s32.totalorder %s19, 1
      %p110 = por %p108, %p109
      %p112 = scmp.ne.s32.totalorder %s97, %s111
      %p113 = scmp.eq.s32.totalorder %s19, 0
      %p114 = por %p112, %p113
      %s115 = ssub.s32 %s13, %s20
      %p116 = scmp.eq.s32.totalorder %s115, 0
      %s118 = sadd.s32 %s117, 1
      %s119 = scalar_select %p116, %s117, %s118
      %p122 = pneg %p116
      %p123 = scmp.eq.s32.totalorder %s13, 1
      %p124 = por %p122, %p123
      %p125 = scmp.ne.s32.totalorder %s117, %s120
      %p126 = scmp.eq.s32.totalorder %s13, 0
      %p127 = por %p125, %p126
      %p128 = scmp.ne.s32.totalorder %s117, %s120
      %p129 = scmp.eq.s32.totalorder %s18, 1
      %p130 = por %p128, %p129
      %p131 = scmp.ne.s32.totalorder %s120, %s121
      %p132 = scmp.eq.s32.totalorder %s18, 0
      %p133 = por %p131, %p132
      %p134 = scmp.ne.s32.totalorder %s120, %s121
      %p135 = scmp.eq.s32.totalorder %s19, 1
      %p136 = por %p134, %p135
      %p138 = scmp.ne.s32.totalorder %s121, %s137
      %p139 = scmp.eq.s32.totalorder %s19, 0
      %p140 = por %p138, %p139
      %p141 = scmp.le.s32.totalorder 1, %s13
      %p142 = scmp.lt.s32.totalorder %s13, 3
      %p143 = pnand %p141, %p142
      %p144 = pneg %p143
      // Predicated region
      $region9: #{transformer_decoder_forward.1} parent=5 // pred_check
        _
      $region10: #{transformer_decoder_forward.1} parent=5 // pred_check_branch
        %146 = sbr.rel (%p143) target = $region12
      $region11: #{transformer_decoder_forward.1} parent=5 // pred_region
        %s147 = ssub.s32 %s13, 1
        // Predicated region
        $region13: #{transformer_decoder_forward.1} parent=11 // pred_check
          %p148 = pneg %p86
        $region14: #{transformer_decoder_forward.1} parent=11 // pred_check_branch
          %150 = sbr.rel (%p148) target = $region16
        $region15: #{transformer_decoder_forward.1} parent=11 // pred_region
          _
        $region16: #{transformer_decoder_forward.1} parent=11 // pred_fallthru
          _
        // Predicated region
        $region17: #{transformer_decoder_forward.1} parent=11 // pred_check
          %p151 = pneg %p107
        $region18: #{transformer_decoder_forward.1} parent=11 // pred_check_branch
          %153 = sbr.rel (%p151) target = $region20
        $region19: #{transformer_decoder_forward.1} parent=11 // pred_region
          _
        $region20: #{transformer_decoder_forward.1} parent=11 // pred_fallthru
          _
      $region12: #{transformer_decoder_forward.1} parent=5 // pred_fallthru
        _
      %p154 = scmp.lt.s32.totalorder %s13, 2
      // Predicated region
      $region21: #{transformer_decoder_forward.1} parent=5 // pred_check
        %p155 = pneg %p154
      $region22: #{transformer_decoder_forward.1} parent=5 // pred_check_branch
        %157 = sbr.rel (%p155) target = $region24
      $region23: #{transformer_decoder_forward.1} parent=5 // pred_region
        // Predicated region
        $region25: #{transformer_decoder_forward.1} parent=23 // pred_check
          %p158 = pneg %p33
        $region26: #{transformer_decoder_forward.1} parent=23 // pred_check_branch
          %160 = sbr.rel (%p158) target = $region28
        $region27: #{transformer_decoder_forward.1} parent=23 // pred_region
          %p161 = scmp.lt.s32.totalorder %s13, 1
          %s162 = scalar_select %p161, %s13, 1
          %s163 = smul.addr %s162, 8
          %s164 = scalar_lea.vmem %s0, %s163
        $region28: #{transformer_decoder_forward.1} parent=23 // pred_fallthru
          _
        // Predicated region
        $region29: #{transformer_decoder_forward.1} parent=23 // pred_check
          %p165 = pneg %p59
        $region30: #{transformer_decoder_forward.1} parent=23 // pred_check_branch
          %167 = sbr.rel (%p165) target = $region32
        $region31: #{transformer_decoder_forward.1} parent=23 // pred_region
          %p168 = scmp.lt.s32.totalorder %s13, 1
          %s169 = scalar_select %p168, %s13, 1
          %s170 = scalar_lea.vmem %s1, %s169
        $region32: #{transformer_decoder_forward.1} parent=23 // pred_fallthru
          _
      $region24: #{transformer_decoder_forward.1} parent=5 // pred_fallthru
        _
      %p171 = scmp.le.s32.totalorder 1, %s13
      %p172 = scmp.lt.s32.totalorder %s13, 3
      %p173 = pnand %p171, %p172
      %p174 = pneg %p173
      // Predicated region
      $region33: #{transformer_decoder_forward.1} parent=5 // pred_check
        _
      $region34: #{transformer_decoder_forward.1} parent=5 // pred_check_branch
        %176 = sbr.rel (%p173) target = $region36
      $region35: #{transformer_decoder_forward.1} parent=5 // pred_region
        %s177 = ssub.s32 %s13, 1
        %p178 = scmp.lt.s32.totalorder %s18, 1
        %s179 = scalar_select %p178, %s18, 1
        %s180 = smul.addr %s179, 8
        %s181 = scalar_lea.vmem %s0, %s180
        %p182 = pneg %p39
        %p183 = pneg %p36
        %p184 = scmp.lt.s32.totalorder %s18, 1
        %s185 = scalar_select %p184, %s18, 1
        %s186 = scalar_lea.vmem %s1, %s185
        %p187 = pneg %p65
        %p188 = pneg %p62
        %p189 = pneg %p86
        %p190 = pneg %p83
        %p191 = pneg %p107
        %p192 = pneg %p104
        %p193 = pneg %p133
        %p194 = pneg %p130
        %s195 = sand.u32 %s120, 1
        %s196 = scalar_lea.sflag [#allocation3], %s195
        %s197 = sand.u32 %s120, 1
        %s198 = smul.addr %s197, 8
        %s199 = scalar_lea.vmem [#allocation2], %s198
        %p200 = scmp.lt.s32.totalorder %s18, 1
        %s201 = scalar_select %p200, %s18, 1
        %s202 = smul.addr %s201, 8
        %s203 = scalar_lea.vmem %s0, %s202
        %p204 = scmp.lt.s32.totalorder %s18, 1
        %s205 = scalar_select %p204, %s18, 1
        %s206 = scalar_lea.vmem %s1, %s205
        %v208 = vld [vmem:[%s203] sm:$0xff]
        %v209 = vld [vmem:[%s206] sm:$0x1]
        %v210 = vld [vmem:[%s2] sm:$0xf]
        %v211 = vld [vmem:[%s2 + $0x4] sm:$0xf]
        %v212 = vld [vmem:[%s2 + $0x8] sm:$0xf]
        %v213 = vld [vmem:[%s2 + $0xc] sm:$0xf]
        %v214 = vpack.c.bf16 %v208, %v208
        %v215 = vld [vmem:[%s3] sm:$0x1]
        %v216 = vperm.slane %v215, 0
        %v221 = vunpack.c.l.b16 %v210
        %v222 = vunpack.c.l.b16 %v211
        %v223 = vunpack.c.l.b16 %v212
        %v224 = vunpack.c.l.b16 %v213
        %v225 = vpack.c.b16 %v222, %v221
        %v226 = vpack.c.b16 %v224, %v223
        %vm229 = vcmask 261120
        %v231 = vsel %vm229, %v214, 0
        %233 = vmatpush.bf16.msra.mxu0 0
        %234 = vmatpush.bf16.msra.mxu0 0
        %235 = vmatpush.bf16.msra.mxu0 0
        %236 = vmatpush.bf16.msra.mxu0 0
        %237 = vmatpush.bf16.msra.mxu0 0
        %238 = vmatpush.bf16.msra.mxu0 0
        %239 = vmatpush.bf16.msra.mxu0 %v226
        %240 = vmatpush.bf16.msra.mxu0 %v225
        %241 = vmatmul.bf16.gmra.mxu0 %v231
        %v242 = vpop.f32.mrf.mxu0
        %v243 = vadd.f32 %v216, %v242
        %v244 = vpop.f32.mrf.mxu0
        %245 = vdwg.mxu0
        %v246 = vpack.c.bf16 %v243, %v243
        %v248 = vperm.slane %v209, 0
        %251 = vrot.lane.b32.xlu0 %v246, 96
        %v252 = vpop.permute.xlu0 %251
        %vm253 = vcmask 130048
        %v255 = vsel %vm253, %v246, 0
        %v258 = vsel %vm253, %v252, 0
        %260 = vmatpush.bf16.xpose.msra.mxu0 0
        %261 = vmatpush.bf16.xpose.msra.mxu0 0
        %262 = vmatpush.bf16.xpose.msra.mxu0 0
        %263 = vmatpush.bf16.xpose.msra.mxu0 0
        %264 = vmatpush.bf16.xpose.msra.mxu0 0
        %265 = vmatpush.bf16.xpose.msra.mxu0 0
        %266 = vmatpush.bf16.xpose.msra.mxu0 0
        %267 = vmatpush.bf16.xpose.msra.mxu0 %v258
        %268 = vmatmul.bf16.gmra.mxu0 %v255
        %v269 = vpop.f32.mrf.mxu0
        %v270 = vadd.f32 %v248, %v269
        %v271 = vpop.f32.mrf.mxu0
        %272 = vdwg.mxu0
        %vm273 = vcmask 64512
        %v274 = vsel %vm273, %v270, -inf
        %275 = vmax.xlane.f32.xlu0 %v274
        %v276 = vpop.xlane.xlu0 %275
        %v277 = vsub.f32 %v270, %v276
        %v278 = vmul.f32 %v277, 1.442695
        %v279 = vpow.pop %v278
        %v280 = vsel %vm273, %v279, 0.0
        %281 = vadd.xlane.f32.xlu0 %v280
        %v282 = vpop.xlane.xlu0 %281
        %v283 = vrcp.pop %v282
        %v284 = vmul.f32 %v279, %v283
        %v285 = vpack.c.bf16 %v284, %v284
        %287 = vrot.lane.b32.xlu0 %v243, 64
        %v288 = vpop.permute.xlu0 %287
        %v291 = vsel %vm273, %v285, 0
        %293 = vmatpush.msra.mxu0 0.0
        %294 = vmatpush.msra.mxu0 0.0
        %295 = vmatpush.msra.mxu0 0.0
        %296 = vmatpush.msra.mxu0 0.0
        %297 = vmatpush.msra.mxu0 0.0
        %298 = vmatpush.msra.mxu0 0.0
        %299 = vmatpush.msra.mxu0 0.0
        %300 = vmatpush.msra.mxu0 0.0
        %301 = vmatpush.msra.mxu0 0.0
        %302 = vmatpush.msra.mxu0 0.0
        %303 = vmatpush.msra.mxu0 0.0
        %304 = vmatpush.msra.mxu0 0.0
        %305 = vmatpush.msra.mxu0 0.0
        %306 = vmatpush.msra.mxu0 0.0
        %307 = vmatpush.msra.mxu0 0.0
        %308 = vmatpush.msra.mxu0 %v288
        %309 = vmatmul.bf16.gmra.mxu0 %v291
        %v310 = vpop.f32.mrf.mxu0
        %v311 = vadd.f32 0.0, %v310
        %v312 = vpop.f32.mrf.mxu0
        %313 = vdwg.mxu0
        %314 = vrot.lane.b32.xlu0 %v246, 112
        %v315 = vpop.permute.xlu0 %314
        %316 = vrot.lane.b32.xlu0 %v246, 80
        %v317 = vpop.permute.xlu0 %316
        %v319 = vsel %vm253, %v315, 0
        %v322 = vsel %vm253, %v317, 0
        %324 = vmatpush.bf16.xpose.msra.mxu0 0
        %325 = vmatpush.bf16.xpose.msra.mxu0 0
        %326 = vmatpush.bf16.xpose.msra.mxu0 0
        %327 = vmatpush.bf16.xpose.msra.mxu0 0
        %328 = vmatpush.bf16.xpose.msra.mxu0 0
        %329 = vmatpush.bf16.xpose.msra.mxu0 0
        %330 = vmatpush.bf16.xpose.msra.mxu0 0
        %331 = vmatpush.bf16.xpose.msra.mxu0 %v322
        %332 = vmatmul.bf16.gmra.mxu0 %v319
        %v333 = vpop.f32.mrf.mxu0
        %v334 = vadd.f32 %v248, %v333
        %v335 = vpop.f32.mrf.mxu0
        %336 = vdwg.mxu0
        %v337 = vsel %vm273, %v334, -inf
        %338 = vmax.xlane.f32.xlu0 %v337
        %v339 = vpop.xlane.xlu0 %338
        %v340 = vsub.f32 %v334, %v339
        %v341 = vmul.f32 %v340, 1.442695
        %v342 = vpow.pop %v341
        %v343 = vsel %vm273, %v342, 0.0
        %344 = vadd.xlane.f32.xlu0 %v343
        %v345 = vpop.xlane.xlu0 %344
        %v346 = vrcp.pop %v345
        %v347 = vmul.f32 %v342, %v346
        %v348 = vpack.c.bf16 %v347, %v347
        %349 = vrot.lane.b32.xlu0 %v243, 48
        %v350 = vpop.permute.xlu0 %349
        %v353 = vsel %vm273, %v348, 0
        %355 = vmatpush.msra.mxu0 0.0
        %356 = vmatpush.msra.mxu0 0.0
        %357 = vmatpush.msra.mxu0 0.0
        %358 = vmatpush.msra.mxu0 0.0
        %359 = vmatpush.msra.mxu0 0.0
        %360 = vmatpush.msra.mxu0 0.0
        %361 = vmatpush.msra.mxu0 0.0
        %362 = vmatpush.msra.mxu0 0.0
        %363 = vmatpush.msra.mxu0 0.0
        %364 = vmatpush.msra.mxu0 0.0
        %365 = vmatpush.msra.mxu0 0.0
        %366 = vmatpush.msra.mxu0 0.0
        %367 = vmatpush.msra.mxu0 0.0
        %368 = vmatpush.msra.mxu0 0.0
        %369 = vmatpush.msra.mxu0 0.0
        %370 = vmatpush.msra.mxu0 %v350
        %371 = vmatmul.bf16.gmra.mxu0 %v353
        %v372 = vpop.f32.mrf.mxu0
        %v373 = vadd.f32 0.0, %v372
        %v374 = vpop.f32.mrf.mxu0
        %375 = vdwg.mxu0
        %377 = vrot.lane.b32.xlu0 %v373, 16
        %v378 = vpop.permute.xlu0 %377
        %v380 = vsel %vm253, %v311, %v378
        %v381 = vld [vmem:[%s2 + $0x10] sm:$0xf]
        %v382 = vld [vmem:[%s2 + $0x14] sm:$0xf]
        %v383 = vld [vmem:[%s2 + $0x18] sm:$0xf]
        %v384 = vld [vmem:[%s2 + $0x1c] sm:$0xf]
        %v385 = vpack.c.bf16 %v380, %v380
        %v386 = vld [vmem:[%s3 + $0x1] sm:$0x1]
        %v387 = vperm.slane %v386, 0
        %v392 = vunpack.c.l.b16 %v381
        %v393 = vunpack.c.l.b16 %v382
        %v394 = vunpack.c.l.b16 %v383
        %v395 = vunpack.c.l.b16 %v384
        %v396 = vpack.c.b16 %v393, %v392
        %v397 = vpack.c.b16 %v395, %v394
        %v401 = vsel %vm229, %v385, 0
        %403 = vmatpush.bf16.msra.mxu0 0
        %404 = vmatpush.bf16.msra.mxu0 0
        %405 = vmatpush.bf16.msra.mxu0 0
        %406 = vmatpush.bf16.msra.mxu0 0
        %407 = vmatpush.bf16.msra.mxu0 0
        %408 = vmatpush.bf16.msra.mxu0 0
        %409 = vmatpush.bf16.msra.mxu0 %v397
        %410 = vmatpush.bf16.msra.mxu0 %v396
        %411 = vmatmul.bf16.gmra.mxu0 %v401
        %v412 = vpop.f32.mrf.mxu0
        %v413 = vadd.f32 %v387, %v412
        %v414 = vpop.f32.mrf.mxu0
        %415 = vdwg.mxu0
        %v416 = vadd.f32 %v208, %v413
        %v417 = vld [vmem:[%s3 + $0x2] sm:$0x1]
        %v418 = vld [vmem:[%s3 + $0x3] sm:$0x1]
        %v419 = vsel %vm229, %v416, 0.0
        %420 = vadd.xlane.f32.xlu0 %v419
        %v421 = vpop.xlane.xlu0 %420
        %v422 = vrcp.pop 32.0
        %v423 = vmul.f32 32.0, %v422
        %v424 = vsub.f32 1.0, %v423
        %v425 = vmul.f32 %v422, %v424
        %v426 = vadd.f32 %v422, %v425
        %vm427 = vweird.f32 %v422
        %v428 = vsel %vm427, %v422, %v426
        %v429 = vmul.f32 %v421, %v428
        %v430 = vsub.f32 %v416, %v429
        %v431 = vmul.f32 %v430, %v430
        %v432 = vsel %vm229, %v431, 0.0
        %433 = vadd.xlane.f32.xlu0 %v432
        %v434 = vpop.xlane.xlu0 %433
        %v435 = vmul.f32 %v434, %v428
        %v436 = vadd.f32 %v435, 1e-05
        %v437 = vrsqrt.pop %v436
        %v438 = vmul.f32 %v437, %v436
        %v439 = vmul.f32 %v438, %v437
        %v440 = vmul.f32 0.5, %v439
        %v441 = vsub.f32 1.5, %v440
        %v442 = vmul.f32 %v437, %v441
        %vm443 = vweird.f32 %v436
        %vm444 = vweird.f32 %v437
        %vm445 = vmor %vm443, %vm444
        %v446 = vsel %vm445, %v437, %v442
        %v447 = vmul.f32 %v430, %v446
        %v448 = vperm.slane %v417, 0
        %v449 = vmul.f32 %v447, %v448
        %v450 = vperm.slane %v418, 0
        %v451 = vadd.f32 %v449, %v450
        %v452 = vld [vmem:[%s2 + $0x20] sm:$0xf]
        %v453 = vld [vmem:[%s2 + $0x24] sm:$0xf]
        %v454 = vld [vmem:[%s2 + $0x28] sm:$0xf]
        %v455 = vld [vmem:[%s2 + $0x2c] sm:$0xf]
        %v456 = vpack.c.bf16 %v451, %v451
        %v457 = vld [vmem:[%s3 + $0x4] sm:$0x1]
        %v458 = vperm.slane %v457, 0
        %v463 = vunpack.c.l.b16 %v452
        %v464 = vunpack.c.l.b16 %v453
        %v465 = vunpack.c.l.b16 %v454
        %v466 = vunpack.c.l.b16 %v455
        %v467 = vpack.c.b16 %v464, %v463
        %v468 = vpack.c.b16 %v466, %v465
        %v472 = vsel %vm229, %v456, 0
        %474 = vmatpush.bf16.msra.mxu0 0
        %475 = vmatpush.bf16.msra.mxu0 0
        %476 = vmatpush.bf16.msra.mxu0 0
        %477 = vmatpush.bf16.msra.mxu0 0
        %478 = vmatpush.bf16.msra.mxu0 0
        %479 = vmatpush.bf16.msra.mxu0 0
        %480 = vmatpush.bf16.msra.mxu0 %v468
        %481 = vmatpush.bf16.msra.mxu0 %v467
        %482 = vmatmul.bf16.gmra.mxu0 %v472
        %v483 = vpop.f32.mrf.mxu0
        %v484 = vadd.f32 %v458, %v483
        %v485 = vpop.f32.mrf.mxu0
        %486 = vdwg.mxu0
        %v487 = vmax.f32 %v484, 0.0
        %v488 = vld [vmem:[%s2 + $0x30] sm:$0xf]
        %v489 = vld [vmem:[%s2 + $0x34] sm:$0xf]
        %v490 = vld [vmem:[%s2 + $0x38] sm:$0xf]
        %v491 = vld [vmem:[%s2 + $0x3c] sm:$0xf]
        %v492 = vld [vmem:[%s2 + $0x40] sm:$0xf]
        %v493 = vld [vmem:[%s2 + $0x44] sm:$0xf]
        %v494 = vld [vmem:[%s2 + $0x48] sm:$0xf]
        %v495 = vld [vmem:[%s2 + $0x4c] sm:$0xf]
        %v496 = vld [vmem:[%s2 + $0x50] sm:$0xf]
        %v497 = vld [vmem:[%s2 + $0x54] sm:$0xf]
        %v498 = vld [vmem:[%s2 + $0x58] sm:$0xf]
        %v499 = vld [vmem:[%s2 + $0x5c] sm:$0xf]
        %v500 = vld [vmem:[%s2 + $0x60] sm:$0xf]
        %v501 = vld [vmem:[%s2 + $0x64] sm:$0xf]
        %v502 = vld [vmem:[%s2 + $0x68] sm:$0xf]
        %v503 = vld [vmem:[%s2 + $0x6c] sm:$0xf]
        %v504 = vpack.c.bf16 %v487, %v487
        %v521 = vunpack.c.l.b16 %v488
        %v522 = vunpack.c.l.b16 %v489
        %v523 = vunpack.c.l.b16 %v490
        %v524 = vunpack.c.l.b16 %v491
        %v525 = vunpack.c.l.b16 %v492
        %v526 = vunpack.c.l.b16 %v493
        %v527 = vunpack.c.l.b16 %v494
        %v528 = vunpack.c.l.b16 %v495
        %v529 = vunpack.c.l.b16 %v496
        %v530 = vunpack.c.l.b16 %v497
        %v531 = vunpack.c.l.b16 %v498
        %v532 = vunpack.c.l.b16 %v499
        %v533 = vunpack.c.l.b16 %v500
        %v534 = vunpack.c.l.b16 %v501
        %v535 = vunpack.c.l.b16 %v502
        %v536 = vunpack.c.l.b16 %v503
        %v537 = vpack.c.b16 %v522, %v521
        %v538 = vpack.c.b16 %v524, %v523
        %v539 = vpack.c.b16 %v526, %v525
        %v540 = vpack.c.b16 %v528, %v527
        %v541 = vpack.c.b16 %v530, %v529
        %v542 = vpack.c.b16 %v532, %v531
        %v543 = vpack.c.b16 %v534, %v533
        %v544 = vpack.c.b16 %v536, %v535
        %553 = vmatpush.bf16.msra.mxu0 %v544
        %554 = vmatpush.bf16.msra.mxu0 %v543
        %555 = vmatpush.bf16.msra.mxu0 %v542
        %556 = vmatpush.bf16.msra.mxu0 %v541
        %557 = vmatpush.bf16.msra.mxu0 %v540
        %558 = vmatpush.bf16.msra.mxu0 %v539
        %559 = vmatpush.bf16.msra.mxu0 %v538
        %560 = vmatpush.bf16.msra.mxu0 %v537
        %561 = vmatmul.bf16.gmra.mxu0 %v504
        %v562 = vpop.f32.mrf.mxu0
        %v563 = vadd.f32 0.0, %v562
        %v564 = vpop.f32.mrf.mxu0
        %565 = vdwg.mxu0
        %v566 = vadd.f32 %v451, %v563
        %v567 = vld [vmem:[%s3 + $0x5] sm:$0x1]
        %v568 = vperm.slane %v567, 0
        %v569 = vadd.f32 %v566, %v568
        %v570 = vld [vmem:[%s3 + $0x6] sm:$0x1]
        %v571 = vld [vmem:[%s3 + $0x7] sm:$0x1]
        %v572 = vsel %vm229, %v569, 0.0
        %573 = vadd.xlane.f32.xlu0 %v572
        %v574 = vpop.xlane.xlu0 %573
        %v575 = vmul.f32 %v574, %v428
        %v576 = vsub.f32 %v569, %v575
        %v577 = vmul.f32 %v576, %v576
        %v578 = vsel %vm229, %v577, 0.0
        %579 = vadd.xlane.f32.xlu0 %v578
        %v580 = vpop.xlane.xlu0 %579
        %v581 = vmul.f32 %v580, %v428
        %v582 = vadd.f32 %v581, 1e-05
        %v583 = vrsqrt.pop %v582
        %v584 = vmul.f32 %v583, %v582
        %v585 = vmul.f32 %v584, %v583
        %v586 = vmul.f32 0.5, %v585
        %v587 = vsub.f32 1.5, %v586
        %v588 = vmul.f32 %v583, %v587
        %vm589 = vweird.f32 %v582
        %vm590 = vweird.f32 %v583
        %vm591 = vmor %vm589, %vm590
        %v592 = vsel %vm591, %v583, %v588
        %v593 = vmul.f32 %v576, %v592
        %v594 = vperm.slane %v570, 0
        %v595 = vmul.f32 %v593, %v594
        %v596 = vperm.slane %v571, 0
        %v597 = vadd.f32 %v595, %v596
        %v598 = vld [vmem:[%s2 + $0x100] sm:$0xf]
        %v599 = vld [vmem:[%s2 + $0x104] sm:$0xf]
        %v600 = vld [vmem:[%s2 + $0x108] sm:$0xf]
        %v601 = vld [vmem:[%s2 + $0x10c] sm:$0xf]
        %v602 = vld [vmem:[%s2 + $0x110] sm:$0xf]
        %v603 = vld [vmem:[%s2 + $0x114] sm:$0xf]
        %v604 = vld [vmem:[%s2 + $0x118] sm:$0xf]
        %v605 = vld [vmem:[%s2 + $0x11c] sm:$0xf]
        %v606 = vpack.c.bf16 %v597, %v597
        %v611 = vunpack.c.l.b16 %v602
        %v612 = vunpack.c.l.b16 %v603
        %v613 = vunpack.c.l.b16 %v604
        %v614 = vunpack.c.l.b16 %v605
        %v615 = vpack.c.b16 %v612, %v611
        %v616 = vpack.c.b16 %v614, %v613
        %v620 = vsel %vm229, %v606, 0
        %622 = vmatpush.bf16.msra.mxu0 0
        %623 = vmatpush.bf16.msra.mxu0 0
        %624 = vmatpush.bf16.msra.mxu0 0
        %625 = vmatpush.bf16.msra.mxu0 0
        %626 = vmatpush.bf16.msra.mxu0 0
        %627 = vmatpush.bf16.msra.mxu0 0
        %628 = vmatpush.bf16.msra.mxu0 %v616
        %629 = vmatpush.bf16.msra.mxu0 %v615
        %630 = vmatmul.bf16.gmra.mxu0 %v620
        %v631 = vpop.f32.mrf.mxu0
        %v632 = vadd.f32 0.0, %v631
        %v633 = vpop.f32.mrf.mxu0
        %634 = vdwg.mxu0
        %v639 = vunpack.c.l.b16 %v598
        %v640 = vunpack.c.l.b16 %v599
        %v641 = vunpack.c.l.b16 %v600
        %v642 = vunpack.c.l.b16 %v601
        %v643 = vpack.c.b16 %v640, %v639
        %v644 = vpack.c.b16 %v642, %v641
        %647 = vmatpush.bf16.msra.mxu0 0
        %648 = vmatpush.bf16.msra.mxu0 0
        %649 = vmatpush.bf16.msra.mxu0 0
        %650 = vmatpush.bf16.msra.mxu0 0
        %651 = vmatpush.bf16.msra.mxu0 0
        %652 = vmatpush.bf16.msra.mxu0 0
        %653 = vmatpush.bf16.msra.mxu0 %v644
        %654 = vmatpush.bf16.msra.mxu0 %v643
        %655 = vmatmul.bf16.gmra.mxu0 %v620
        %v656 = vpop.f32.mrf.mxu0
        %v657 = vadd.f32 %v632, %v656
        %v658 = vpop.f32.mrf.mxu0
        %659 = vdwg.mxu0
        %v660 = vld [vmem:[%s3 + $0x11] sm:$0x1]
        %v661 = vperm.slane %v660, 0
        %v662 = vadd.f32 %v657, %v661
        %v663 = vld [vmem:[%s2 + $0x90] sm:$0xf]
        %v664 = vld [vmem:[%s2 + $0x94] sm:$0xf]
        %v665 = vld [vmem:[%s2 + $0x98] sm:$0xf]
        %v666 = vld [vmem:[%s2 + $0x9c] sm:$0xf]
        %v667 = vpack.c.bf16 %v662, %v662
        %v668 = vld [vmem:[%s3 + $0x9] sm:$0x1]
        %v669 = vperm.slane %v668, 0
        %v674 = vunpack.c.l.b16 %v663
        %v675 = vunpack.c.l.b16 %v664
        %v676 = vunpack.c.l.b16 %v665
        %v677 = vunpack.c.l.b16 %v666
        %v678 = vpack.c.b16 %v675, %v674
        %v679 = vpack.c.b16 %v677, %v676
        %v683 = vsel %vm229, %v667, 0
        %685 = vmatpush.bf16.msra.mxu0 0
        %686 = vmatpush.bf16.msra.mxu0 0
        %687 = vmatpush.bf16.msra.mxu0 0
        %688 = vmatpush.bf16.msra.mxu0 0
        %689 = vmatpush.bf16.msra.mxu0 0
        %690 = vmatpush.bf16.msra.mxu0 0
        %691 = vmatpush.bf16.msra.mxu0 %v679
        %692 = vmatpush.bf16.msra.mxu0 %v678
        %693 = vmatmul.bf16.gmra.mxu0 %v683
        %v694 = vpop.f32.mrf.mxu0
        %v695 = vadd.f32 %v669, %v694
        %v696 = vpop.f32.mrf.mxu0
        %697 = vdwg.mxu0
        %v698 = vpack.c.bf16 %v695, %v695
        %700 = vrot.lane.b32.xlu0 %v698, 96
        %v701 = vpop.permute.xlu0 %700
        %v703 = vsel %vm253, %v698, 0
        %v706 = vsel %vm253, %v701, 0
        %708 = vmatpush.bf16.xpose.msra.mxu0 0
        %709 = vmatpush.bf16.xpose.msra.mxu0 0
        %710 = vmatpush.bf16.xpose.msra.mxu0 0
        %711 = vmatpush.bf16.xpose.msra.mxu0 0
        %712 = vmatpush.bf16.xpose.msra.mxu0 0
        %713 = vmatpush.bf16.xpose.msra.mxu0 0
        %714 = vmatpush.bf16.xpose.msra.mxu0 0
        %715 = vmatpush.bf16.xpose.msra.mxu0 %v706
        %716 = vmatmul.bf16.gmra.mxu0 %v703
        %v717 = vpop.f32.mrf.mxu0
        %v718 = vadd.f32 %v248, %v717
        %v719 = vpop.f32.mrf.mxu0
        %720 = vdwg.mxu0
        %v721 = vsel %vm273, %v718, -inf
        %722 = vmax.xlane.f32.xlu0 %v721
        %v723 = vpop.xlane.xlu0 %722
        %v724 = vsub.f32 %v718, %v723
        %v725 = vmul.f32 %v724, 1.442695
        %v726 = vpow.pop %v725
        %v727 = vsel %vm273, %v726, 0.0
        %728 = vadd.xlane.f32.xlu0 %v727
        %v729 = vpop.xlane.xlu0 %728
        %v730 = vrcp.pop %v729
        %v731 = vmul.f32 %v726, %v730
        %v732 = vpack.c.bf16 %v731, %v731
        %734 = vrot.lane.b32.xlu0 %v695, 64
        %v735 = vpop.permute.xlu0 %734
        %v738 = vsel %vm273, %v732, 0
        %740 = vmatpush.msra.mxu0 0.0
        %741 = vmatpush.msra.mxu0 0.0
        %742 = vmatpush.msra.mxu0 0.0
        %743 = vmatpush.msra.mxu0 0.0
        %744 = vmatpush.msra.mxu0 0.0
        %745 = vmatpush.msra.mxu0 0.0
        %746 = vmatpush.msra.mxu0 0.0
        %747 = vmatpush.msra.mxu0 0.0
        %748 = vmatpush.msra.mxu0 0.0
        %749 = vmatpush.msra.mxu0 0.0
        %750 = vmatpush.msra.mxu0 0.0
        %751 = vmatpush.msra.mxu0 0.0
        %752 = vmatpush.msra.mxu0 0.0
        %753 = vmatpush.msra.mxu0 0.0
        %754 = vmatpush.msra.mxu0 0.0
        %755 = vmatpush.msra.mxu0 %v735
        %756 = vmatmul.bf16.gmra.mxu0 %v738
        %v757 = vpop.f32.mrf.mxu0
        %v758 = vadd.f32 0.0, %v757
        %v759 = vpop.f32.mrf.mxu0
        %760 = vdwg.mxu0
        %761 = vrot.lane.b32.xlu0 %v698, 112
        %v762 = vpop.permute.xlu0 %761
        %763 = vrot.lane.b32.xlu0 %v698, 80
        %v764 = vpop.permute.xlu0 %763
        %v766 = vsel %vm253, %v762, 0
        %v769 = vsel %vm253, %v764, 0
        %771 = vmatpush.bf16.xpose.msra.mxu0 0
        %772 = vmatpush.bf16.xpose.msra.mxu0 0
        %773 = vmatpush.bf16.xpose.msra.mxu0 0
        %774 = vmatpush.bf16.xpose.msra.mxu0 0
        %775 = vmatpush.bf16.xpose.msra.mxu0 0
        %776 = vmatpush.bf16.xpose.msra.mxu0 0
        %777 = vmatpush.bf16.xpose.msra.mxu0 0
        %778 = vmatpush.bf16.xpose.msra.mxu0 %v769
        %779 = vmatmul.bf16.gmra.mxu0 %v766
        %v780 = vpop.f32.mrf.mxu0
        %v781 = vadd.f32 %v248, %v780
        %v782 = vpop.f32.mrf.mxu0
        %783 = vdwg.mxu0
        %v784 = vsel %vm273, %v781, -inf
        %785 = vmax.xlane.f32.xlu0 %v784
        %v786 = vpop.xlane.xlu0 %785
        %v787 = vsub.f32 %v781, %v786
        %v788 = vmul.f32 %v787, 1.442695
        %v789 = vpow.pop %v788
        %v790 = vsel %vm273, %v789, 0.0
        %791 = vadd.xlane.f32.xlu0 %v790
        %v792 = vpop.xlane.xlu0 %791
        %v793 = vrcp.pop %v792
        %v794 = vmul.f32 %v789, %v793
        %v795 = vpack.c.bf16 %v794, %v794
        %796 = vrot.lane.b32.xlu0 %v695, 48
        %v797 = vpop.permute.xlu0 %796
        %v800 = vsel %vm273, %v795, 0
        %802 = vmatpush.msra.mxu0 0.0
        %803 = vmatpush.msra.mxu0 0.0
        %804 = vmatpush.msra.mxu0 0.0
        %805 = vmatpush.msra.mxu0 0.0
        %806 = vmatpush.msra.mxu0 0.0
        %807 = vmatpush.msra.mxu0 0.0
        %808 = vmatpush.msra.mxu0 0.0
        %809 = vmatpush.msra.mxu0 0.0
        %810 = vmatpush.msra.mxu0 0.0
        %811 = vmatpush.msra.mxu0 0.0
        %812 = vmatpush.msra.mxu0 0.0
        %813 = vmatpush.msra.mxu0 0.0
        %814 = vmatpush.msra.mxu0 0.0
        %815 = vmatpush.msra.mxu0 0.0
        %816 = vmatpush.msra.mxu0 0.0
        %817 = vmatpush.msra.mxu0 %v797
        %818 = vmatmul.bf16.gmra.mxu0 %v800
        %v819 = vpop.f32.mrf.mxu0
        %v820 = vadd.f32 0.0, %v819
        %v821 = vpop.f32.mrf.mxu0
        %822 = vdwg.mxu0
        %824 = vrot.lane.b32.xlu0 %v820, 16
        %v825 = vpop.permute.xlu0 %824
        %v827 = vsel %vm253, %v758, %v825
        %v828 = vld [vmem:[%s2 + $0xa0] sm:$0xf]
        %v829 = vld [vmem:[%s2 + $0xa4] sm:$0xf]
        %v830 = vld [vmem:[%s2 + $0xa8] sm:$0xf]
        %v831 = vld [vmem:[%s2 + $0xac] sm:$0xf]
        %v832 = vpack.c.bf16 %v827, %v827
        %v833 = vld [vmem:[%s3 + $0xa] sm:$0x1]
        %v834 = vperm.slane %v833, 0
        %v839 = vunpack.c.l.b16 %v828
        %v840 = vunpack.c.l.b16 %v829
        %v841 = vunpack.c.l.b16 %v830
        %v842 = vunpack.c.l.b16 %v831
        %v843 = vpack.c.b16 %v840, %v839
        %v844 = vpack.c.b16 %v842, %v841
        %v848 = vsel %vm229, %v832, 0
        %850 = vmatpush.bf16.msra.mxu0 0
        %851 = vmatpush.bf16.msra.mxu0 0
        %852 = vmatpush.bf16.msra.mxu0 0
        %853 = vmatpush.bf16.msra.mxu0 0
        %854 = vmatpush.bf16.msra.mxu0 0
        %855 = vmatpush.bf16.msra.mxu0 0
        %856 = vmatpush.bf16.msra.mxu0 %v844
        %857 = vmatpush.bf16.msra.mxu0 %v843
        %858 = vmatmul.bf16.gmra.mxu0 %v848
        %v859 = vpop.f32.mrf.mxu0
        %v860 = vadd.f32 %v834, %v859
        %v861 = vpop.f32.mrf.mxu0
        %862 = vdwg.mxu0
        %v863 = vadd.f32 %v662, %v860
        %v864 = vld [vmem:[%s3 + $0xb] sm:$0x1]
        %v865 = vld [vmem:[%s3 + $0xc] sm:$0x1]
        %v866 = vsel %vm229, %v863, 0.0
        %867 = vadd.xlane.f32.xlu0 %v866
        %v868 = vpop.xlane.xlu0 %867
        %v869 = vmul.f32 %v868, %v428
        %v870 = vsub.f32 %v863, %v869
        %v871 = vmul.f32 %v870, %v870
        %v872 = vsel %vm229, %v871, 0.0
        %873 = vadd.xlane.f32.xlu0 %v872
        %v874 = vpop.xlane.xlu0 %873
        %v875 = vmul.f32 %v874, %v428
        %v876 = vadd.f32 %v875, 1e-05
        %v877 = vrsqrt.pop %v876
        %v878 = vmul.f32 %v877, %v876
        %v879 = vmul.f32 %v878, %v877
        %v880 = vmul.f32 0.5, %v879
        %v881 = vsub.f32 1.5, %v880
        %v882 = vmul.f32 %v877, %v881
        %vm883 = vweird.f32 %v876
        %vm884 = vweird.f32 %v877
        %vm885 = vmor %vm883, %vm884
        %v886 = vsel %vm885, %v877, %v882
        %v887 = vmul.f32 %v870, %v886
        %v888 = vperm.slane %v864, 0
        %v889 = vmul.f32 %v887, %v888
        %v890 = vperm.slane %v865, 0
        %v891 = vadd.f32 %v889, %v890
        %v892 = vld [vmem:[%s2 + $0xb0] sm:$0xf]
        %v893 = vld [vmem:[%s2 + $0xb4] sm:$0xf]
        %v894 = vld [vmem:[%s2 + $0xb8] sm:$0xf]
        %v895 = vld [vmem:[%s2 + $0xbc] sm:$0xf]
        %v896 = vpack.c.bf16 %v891, %v891
        %v897 = vld [vmem:[%s3 + $0xd] sm:$0x1]
        %v898 = vperm.slane %v897, 0
        %v903 = vunpack.c.l.b16 %v892
        %v904 = vunpack.c.l.b16 %v893
        %v905 = vunpack.c.l.b16 %v894
        %v906 = vunpack.c.l.b16 %v895
        %v907 = vpack.c.b16 %v904, %v903
        %v908 = vpack.c.b16 %v906, %v905
        %v912 = vsel %vm229, %v896, 0
        %914 = vmatpush.bf16.msra.mxu0 0
        %915 = vmatpush.bf16.msra.mxu0 0
        %916 = vmatpush.bf16.msra.mxu0 0
        %917 = vmatpush.bf16.msra.mxu0 0
        %918 = vmatpush.bf16.msra.mxu0 0
        %919 = vmatpush.bf16.msra.mxu0 0
        %920 = vmatpush.bf16.msra.mxu0 %v908
        %921 = vmatpush.bf16.msra.mxu0 %v907
        %922 = vmatmul.bf16.gmra.mxu0 %v912
        %v923 = vpop.f32.mrf.mxu0
        %v924 = vadd.f32 %v898, %v923
        %v925 = vpop.f32.mrf.mxu0
        %926 = vdwg.mxu0
        %v927 = vmax.f32 %v924, 0.0
        %v928 = vld [vmem:[%s2 + $0xc0] sm:$0xf]
        %v929 = vld [vmem:[%s2 + $0xc4] sm:$0xf]
        %v930 = vld [vmem:[%s2 + $0xc8] sm:$0xf]
        %v931 = vld [vmem:[%s2 + $0xcc] sm:$0xf]
        %v932 = vld [vmem:[%s2 + $0xd0] sm:$0xf]
        %v933 = vld [vmem:[%s2 + $0xd4] sm:$0xf]
        %v934 = vld [vmem:[%s2 + $0xd8] sm:$0xf]
        %v935 = vld [vmem:[%s2 + $0xdc] sm:$0xf]
        %v936 = vld [vmem:[%s2 + $0xe0] sm:$0xf]
        %v937 = vld [vmem:[%s2 + $0xe4] sm:$0xf]
        %v938 = vld [vmem:[%s2 + $0xe8] sm:$0xf]
        %v939 = vld [vmem:[%s2 + $0xec] sm:$0xf]
        %v940 = vld [vmem:[%s2 + $0xf0] sm:$0xf]
        %v941 = vld [vmem:[%s2 + $0xf4] sm:$0xf]
        %v942 = vld [vmem:[%s2 + $0xf8] sm:$0xf]
        %v943 = vld [vmem:[%s2 + $0xfc] sm:$0xf]
        %v944 = vpack.c.bf16 %v927, %v927
        %v961 = vunpack.c.l.b16 %v928
        %v962 = vunpack.c.l.b16 %v929
        %v963 = vunpack.c.l.b16 %v930
        %v964 = vunpack.c.l.b16 %v931
        %v965 = vunpack.c.l.b16 %v932
        %v966 = vunpack.c.l.b16 %v933
        %v967 = vunpack.c.l.b16 %v934
        %v968 = vunpack.c.l.b16 %v935
        %v969 = vunpack.c.l.b16 %v936
        %v970 = vunpack.c.l.b16 %v937
        %v971 = vunpack.c.l.b16 %v938
        %v972 = vunpack.c.l.b16 %v939
        %v973 = vunpack.c.l.b16 %v940
        %v974 = vunpack.c.l.b16 %v941
        %v975 = vunpack.c.l.b16 %v942
        %v976 = vunpack.c.l.b16 %v943
        %v977 = vpack.c.b16 %v962, %v961
        %v978 = vpack.c.b16 %v964, %v963
        %v979 = vpack.c.b16 %v966, %v965
        %v980 = vpack.c.b16 %v968, %v967
        %v981 = vpack.c.b16 %v970, %v969
        %v982 = vpack.c.b16 %v972, %v971
        %v983 = vpack.c.b16 %v974, %v973
        %v984 = vpack.c.b16 %v976, %v975
        %993 = vmatpush.bf16.msra.mxu0 %v984
        %994 = vmatpush.bf16.msra.mxu0 %v983
        %995 = vmatpush.bf16.msra.mxu0 %v982
        %996 = vmatpush.bf16.msra.mxu0 %v981
        %997 = vmatpush.bf16.msra.mxu0 %v980
        %998 = vmatpush.bf16.msra.mxu0 %v979
        %999 = vmatpush.bf16.msra.mxu0 %v978
        %1000 = vmatpush.bf16.msra.mxu0 %v977
        %1001 = vmatmul.bf16.gmra.mxu0 %v944
        %v1002 = vpop.f32.mrf.mxu0
        %v1003 = vadd.f32 0.0, %v1002
        %v1004 = vpop.f32.mrf.mxu0
        %1005 = vdwg.mxu0
        %v1006 = vadd.f32 %v891, %v1003
        %v1007 = vld [vmem:[%s3 + $0xe] sm:$0x1]
        %v1008 = vperm.slane %v1007, 0
        %v1009 = vadd.f32 %v1006, %v1008
        %v1010 = vld [vmem:[%s3 + $0xf] sm:$0x1]
        %v1011 = vld [vmem:[%s3 + $0x10] sm:$0x1]
        %v1012 = vsel %vm229, %v1009, 0.0
        %1013 = vadd.xlane.f32.xlu0 %v1012
        %v1014 = vpop.xlane.xlu0 %1013
        %v1015 = vmul.f32 %v1014, %v428
        %v1016 = vsub.f32 %v1009, %v1015
        %v1017 = vmul.f32 %v1016, %v1016
        %v1018 = vsel %vm229, %v1017, 0.0
        %1019 = vadd.xlane.f32.xlu0 %v1018
        %v1020 = vpop.xlane.xlu0 %1019
        %v1021 = vmul.f32 %v1020, %v428
        %v1022 = vadd.f32 %v1021, 1e-05
        %v1023 = vrsqrt.pop %v1022
        %v1024 = vmul.f32 %v1023, %v1022
        %v1025 = vmul.f32 %v1024, %v1023
        %v1026 = vmul.f32 0.5, %v1025
        %v1027 = vsub.f32 1.5, %v1026
        %v1028 = vmul.f32 %v1023, %v1027
        %vm1029 = vweird.f32 %v1022
        %vm1030 = vweird.f32 %v1023
        %vm1031 = vmor %vm1029, %vm1030
        %v1032 = vsel %vm1031, %v1023, %v1028
        %v1033 = vmul.f32 %v1016, %v1032
        %v1034 = vperm.slane %v1010, 0
        %v1035 = vmul.f32 %v1033, %v1034
        %v1036 = vperm.slane %v1011, 0
        %v1037 = vadd.f32 %v1035, %v1036
        %v1038 = vadd.f32 %v597, 0.0
        %v1039 = vadd.f32 %v1038, %v1037
        %v1040 = vmul.f32 %v1039, 0.70710677
        %v1041 = vld [vmem:[%s2 + $0x120] sm:$0xf]
        %v1042 = vld [vmem:[%s2 + $0x124] sm:$0xf]
        %v1043 = vld [vmem:[%s2 + $0x128] sm:$0xf]
        %v1044 = vld [vmem:[%s2 + $0x12c] sm:$0xf]
        %v1045 = vpack.c.bf16 %v1040, %v1040
        %v1046 = vld [vmem:[%s3 + $0x12] sm:$0x1]
        %v1047 = vperm.slane %v1046, 0
        %v1052 = vunpack.c.l.b16 %v1041
        %v1053 = vunpack.c.l.b16 %v1042
        %v1054 = vunpack.c.l.b16 %v1043
        %v1055 = vunpack.c.l.b16 %v1044
        %v1056 = vpack.c.b16 %v1053, %v1052
        %v1057 = vpack.c.b16 %v1055, %v1054
        %v1061 = vsel %vm229, %v1045, 0
        %1063 = vmatpush.bf16.msra.mxu0 0
        %1064 = vmatpush.bf16.msra.mxu0 0
        %1065 = vmatpush.bf16.msra.mxu0 0
        %1066 = vmatpush.bf16.msra.mxu0 0
        %1067 = vmatpush.bf16.msra.mxu0 0
        %1068 = vmatpush.bf16.msra.mxu0 0
        %1069 = vmatpush.bf16.msra.mxu0 %v1057
        %1070 = vmatpush.bf16.msra.mxu0 %v1056
        %1071 = vmatmul.bf16.gmra.mxu0 %v1061
        %v1072 = vpop.f32.mrf.mxu0
        %v1073 = vadd.f32 %v1047, %v1072
        %v1074 = vpop.f32.mrf.mxu0
        %1075 = vdwg.mxu0
        %v1076 = vmax.f32 %v1073, 0.0
        %1077 = vst.msk [vmem:[%s199] sm:$0xff] %vm229, %v1076
        %s1078 = sand.u32 %s120, 1
        %s1079 = scalar_lea.sflag [#allocation3], %s1078
        %s1080 = sand.u32 %s120, 1
        %s1081 = smul.addr %s1080, 8
        %s1082 = scalar_lea.vmem [#allocation2], %s1081
        // Predicated region
        $region37: #{transformer_decoder_forward.1} parent=35 // pred_check
          %p1083 = pneg %p130
        $region38: #{transformer_decoder_forward.1} parent=35 // pred_check_branch
          %1085 = sbr.rel (%p1083) target = $region40
        $region39: #{transformer_decoder_forward.1} parent=35 // pred_region
          %1087 = vsyncadd %s1079, 0
          %s1088 = smul.addr %s18, 8
          %s1089 = scalar_lea.hbm %s4, %s1088
          %s1091 = sshll.u32 %s1082, 4
          %s1092 = int_to_ptr.vmem [resolvable:$true] %s1091
          %s1093 = sshll.u32 %s1089, 4
          %s1094 = int_to_ptr.hbm [resolvable:$true] %s1093
          %1096 = dma.vmem_to_hbm [thread:$0]  %s1092, 128, %s1094, %s1079
        $region40: #{transformer_decoder_forward.1} parent=35 // pred_fallthru
          _
      $region36: #{transformer_decoder_forward.1} parent=5 // pred_fallthru
        _
      %p1097 = scmp.le.s32.totalorder 2, %s13
      // Predicated region
      $region41: #{transformer_decoder_forward.1} parent=5 // pred_check
        %p1098 = pneg %p1097
      $region42: #{transformer_decoder_forward.1} parent=5 // pred_check_branch
        %1100 = sbr.rel (%p1098) target = $region44
      $region43: #{transformer_decoder_forward.1} parent=5 // pred_region
        %s1101 = ssub.s32 %s13, 2
        // Predicated region
        $region45: #{transformer_decoder_forward.1} parent=43 // pred_check
          %p1102 = pneg %p136
        $region46: #{transformer_decoder_forward.1} parent=43 // pred_check_branch
          %1104 = sbr.rel (%p1102) target = $region48
        $region47: #{transformer_decoder_forward.1} parent=43 // pred_region
          %s1105 = sand.u32 %s121, 1
          %s1106 = scalar_lea.sflag [#allocation3], %s1105
          %s1107 = sand.u32 %s121, 1
          %s1108 = smul.addr %s1107, 8
          %s1109 = scalar_lea.vmem [#allocation2], %s1108
          %1111 = dma.done %s1106, 128
        $region48: #{transformer_decoder_forward.1} parent=43 // pred_fallthru
          _
      $region44: #{transformer_decoder_forward.1} parent=5 // pred_fallthru
        _
    $region6: #{transformer_decoder_forward.1} parent=1 // loop_footer
      %s17 = sadd.s32 1, %s13
    $region7: #{transformer_decoder_forward.1} parent=1 // loop_footer_branch
      %12 = sbr.rel target = $region3
    $region8: #{transformer_decoder_forward.1} parent=1 // loop_exit
      _
    %1112 = vsyncpa [#allocation3], 1
    %s1113 = scalar_lea.sflag [#allocation3], 1
    %1114 = vsyncpa %s1113, 1

</llo_original>
